<compile_context>
chip_gen: v6e
topology: v6e:2x2x1
jax: 0.10.0
libtpu: 0.0.40
codegen_flags: <defaults>
</compile_context>

<pallas_src>
import numpy as np
import jax
import jax.numpy as jnp
from jax.experimental import pallas as pl
from jax.experimental.pallas import tpu as pltpu


_SQRT_HALF = 0.7071067811865476


# ------------------------------ kernel body ---------------------------------

def _erf(x):
    # Abramowitz & Stegun 7.1.26 polynomial approximation, |error| < 1.5e-7.
    a1, a2, a3, a4, a5 = (0.254829592, -0.284496736, 1.421413741,
                          -1.453152027, 1.061405429)
    p = 0.3275911
    ax = jnp.abs(x)
    t = 1.0 / (1.0 + p * ax)
    poly = ((((a5 * t + a4) * t + a3) * t + a2) * t + a1) * t
    y = 1.0 - poly * jnp.exp(-ax * ax)
    return jnp.where(x < 0.0, -y, y)


def _gelu(x):
    # exact (erf-based) GELU, matches torch.nn.GELU() to ~1e-7.
    return 0.5 * x * (1.0 + _erf(x * _SQRT_HALF))


def _make_convdown_kernel(hp, wp, hq, wq, c1):
    """Fused kernel body (one image per grid step).

    hp, wp : spatial size after the first 2x2 pool (conv2's input grid)
    hq, wq : final spatial size (after the second pool)
    c1     : channels of the intermediate (conv1 output) activation
    """
    m1 = hp * wp               # pooled-map pixels == conv2 output pixels
    pad = wp + 1               # max |row shift| of a 3x3 tap on the flat map

    def kernel(x1_ref, w1_ref, b1_ref, w2_ref, b2_ref, o_ref):
        # ---- stage 1: conv1 (one im2col matmul) + bias + GELU + 2x2 pool ----
        x1 = x1_ref[0]                                        # (4*m1, 9*Cin) bf16
        z1 = jnp.dot(x1, w1_ref[...], preferred_element_type=jnp.float32)
        a1 = _gelu(z1 + b1_ref[...])                          # (4*m1, C1) f32
        # rows are grouped in 4 parity blocks -> pool = max of 4 row blocks
        p = jnp.maximum(jnp.maximum(a1[0:m1], a1[m1:2 * m1]),
                        jnp.maximum(a1[2 * m1:3 * m1], a1[3 * m1:4 * m1]))
        p = p.astype(x1.dtype)                                # (m1, C1) bf16, row = y*wp + x

        # ---- stage 2: in-VMEM shifted-slice im2col + ONE K=9*C1 matmul ------
        zpad = jnp.zeros((pad, c1), dtype=p.dtype)
        ppad = jnp.concatenate([zpad, p, zpad], axis=0)       # (m1 + 2*pad, C1)
        xcoord = jax.lax.broadcasted_iota(jnp.int32, (m1, c1), 0) % wp
        mask_l = xcoord >= 1                                  # kx=0 column valid
        mask_r = xcoord <= wp - 2                             # kx=2 column valid
        taps = []
        for ky in range(3):                                   # static unroll (9 taps)
            for kx in range(3):
                delta = (ky - 1) * wp + (kx - 1)
                t = ppad[pad + delta:pad + delta + m1, :]     # row-shifted slice
                if kx == 0:
                    t = jnp.where(mask_l, t, jnp.zeros_like(t))
                elif kx == 2:
                    t = jnp.where(mask_r, t, jnp.zeros_like(t))
                taps.append(t)
        cols2 = jnp.concatenate(taps, axis=-1)                # (m1, 9*C1) bf16
        z2 = jnp.dot(cols2, w2_ref[...], preferred_element_type=jnp.float32)
        a2 = _gelu(z2 + b2_ref[...])                          # (m1, C2p) f32

        # ---- fused 2x2/stride-2 max-pool of the (hp, wp) conv2 output -------
        out_rows = []
        for u in range(hq):
            ry = jnp.maximum(a2[(2 * u) * wp:(2 * u + 1) * wp, :],
                             a2[(2 * u + 1) * wp:(2 * u + 2) * wp, :])
            for v in range(wq):
                out_rows.append(jnp.maximum(ry[2 * v:2 * v + 1, :],
                                            ry[2 * v + 1:2 * v + 2, :]))
        o_ref[0] = jnp.concatenate(out_rows, axis=0)          # (hq*wq, C2p) lane-dense

    return kernel


# --------------------------- host-side layout glue ---------------------------

def _parity_im2col(x_nhwc):
    """(N,H,W,C) -> (N, 4*(H//2)*(W//2), 9*C) im2col for a 3x3 'same' conv.
    Rows are grouped by output-pixel parity so a 2x2/stride-2 max-pool of the
    conv output becomes an elementwise max of the 4 row blocks; within each
    block rows are the pooled pixels (i, j) in row-major order."""
    n, h, w, c = x_nhwc.shape
    xp = jnp.pad(x_nhwc, ((0, 0), (1, 1), (1, 1), (0, 0)))
    cols = jnp.concatenate(
        [xp[:, ky:ky + h, kx:kx + w, :] for ky in range(3) for kx in range(3)],
        axis=-1)                                              # (N,H,W,9C)
    blocks = [cols[:, py::2, px::2, :].reshape(n, (h // 2) * (w // 2), 9 * c)
              for py in (0, 1) for px in (0, 1)]
    return jnp.concatenate(blocks, axis=1)                    # (N,4*Ho*Wo,9C)


# --------------------------------- forward -----------------------------------

def convdown_forward(params, x_nchw):
    n, cin, h, w = x_nchw.shape
    assert h % 4 == 0 and w % 4 == 0, "fused ConvDown kernel needs H, W divisible by 4"
    w1, b1 = params["conv1"]          # (3,3,Cin,C1) HWIO, (C1,)
    w2, b2 = params["conv2"]          # (3,3,C1,C2)  HWIO, (C2,)
    c1, c2 = w1.shape[-1], w2.shape[-1]
    hp, wp = h // 2, w // 2           # spatial size after pool 1
    hq, wq = hp // 2, wp // 2         # final spatial size
    c2p = ((c2 + 127) // 128) * 128   # lane-dense (zero-padded) output channels

    # conv1 im2col (layout plumbing), bf16 matmul operands, f32 biases.
    x1 = _parity_im2col(jnp.transpose(x_nchw, (0, 2, 3, 1))).astype(jnp.bfloat16)
    w1f = w1.reshape(9 * cin, c1).astype(jnp.bfloat16)
    b1f = b1.reshape(1, c1).astype(jnp.float32)
    w2f = jnp.pad(w2.reshape(9 * c1, c2), ((0, 0), (0, c2p - c2))).astype(jnp.bfloat16)
    b2f = jnp.pad(b2.reshape(1, c2), ((0, 0), (0, c2p - c2))).astype(jnp.float32)

    rows1 = 4 * hp * wp
    rows2 = hq * wq

    flops = n * (2 * rows1 * (9 * cin) * c1 + 2 * (hp * wp) * (9 * c1) * c2p)
    transcendentals = n * (rows1 * c1 + hp * wp * c2p)        # one exp per GELU element
    bytes_accessed = (x1.size * 2 + w1f.size * 2 + w2f.size * 2
                      + b1f.size * 4 + b2f.size * 4 + n * rows2 * c2p * 4)

    out = pl.pallas_call(
        _make_convdown_kernel(hp, wp, hq, wq, c1),
        out_shape=jax.ShapeDtypeStruct((n, rows2, c2p), jnp.float32),
        grid=(n,),
        in_specs=[
            pl.BlockSpec((1, rows1, 9 * cin), lambda i: (i, 0, 0)),
            pl.BlockSpec((9 * cin, c1), lambda i: (0, 0)),
            pl.BlockSpec((1, c1), lambda i: (0, 0)),
            pl.BlockSpec((9 * c1, c2p), lambda i: (0, 0)),
            pl.BlockSpec((1, c2p), lambda i: (0, 0)),
        ],
        out_specs=pl.BlockSpec((1, rows2, c2p), lambda i: (i, 0, 0)),
        compiler_params=pltpu.CompilerParams(
            dimension_semantics=("parallel",)),
        cost_estimate=pl.CostEstimate(
            flops=flops, transcendentals=transcendentals,
            bytes_accessed=bytes_accessed),
    )(x1, w1f, b1f, w2f, b2f)

    # lane-padded (N, hq*wq, 128) -> NCHW with the real C2 channels
    y = out[:, :, :c2].reshape(n, hq, wq, c2)
    return jnp.transpose(y, (0, 3, 1, 2))


# ------------------------------- parameters ----------------------------------

def init_convdown_params(key, inputchannels=4, outputchannels=32,
                         channels=(16, 32)):
    chans = list(channels)
    if chans[0] != inputchannels:
        chans.insert(0, inputchannels)
    if chans[-1] != outputchannels:
        chans.append(outputchannels)
    assert len(chans) == 3, "fused kernel implements the default 2-stage ConvDown"

    def conv_init(k, ci, co):
        kw, kb = jax.random.split(k)
        lim = 1.0 / np.sqrt(ci * 9)
        return (jax.random.uniform(kw, (3, 3, ci, co), jnp.float32, -lim, lim),
                jax.random.uniform(kb, (co,), jnp.float32, -lim, lim))

    k1, k2 = jax.random.split(key)
    return {"conv1": conv_init(k1, chans[0], chans[1]),
            "conv2": conv_init(k2, chans[1], chans[2])}


# ---------------------------- pure-JAX reference ------------------------------

def convdown_reference(params, x_nchw, cast_to_bf16=False):
    def maybe_cast(a):
        if cast_to_bf16:
            return a.astype(jnp.bfloat16).astype(jnp.float32)
        return a

    x = jnp.transpose(x_nchw, (0, 2, 3, 1))
    for name in ("conv1", "conv2"):
        wgt, b = params[name]
        x = jax.lax.conv_general_dilated(
            maybe_cast(x), maybe_cast(wgt), window_strides=(1, 1),
            padding="SAME", dimension_numbers=("NHWC", "HWIO", "NHWC"))
        x = jax.nn.gelu(x + b, approximate=False)
        x = jax.lax.reduce_window(x, -jnp.inf, jax.lax.max,
                                  (1, 2, 2, 1), (1, 2, 2, 1), "VALID")
    return jnp.transpose(x, (0, 3, 1, 2))


if __name__ == "__main__":
    key = jax.random.PRNGKey(0)
    k_params, k_x = jax.random.split(key)

    params = init_convdown_params(k_params, inputchannels=4, outputchannels=32)
    x = jax.random.normal(k_x, (2, 4, 16, 16), jnp.float32)    # NCHW input

    fwd = jax.jit(convdown_forward)
    y = fwd(params, x)
    jax.block_until_ready(y)

    assert y.shape == (2, 32, 4, 4)
    assert bool(jnp.all(jnp.isfinite(y)))

    # Tight check: reference fed the same bf16-rounded matmul operands.
    y_ref_bf16 = convdown_reference(params, x, cast_to_bf16=True)
    np.testing.assert_allclose(np.asarray(y), np.asarray(y_ref_bf16),
                               atol=5e-3, rtol=5e-3)
    # Fidelity check vs. the full-f32 torch-equivalent reference.
    y_ref = convdown_reference(params, x, cast_to_bf16=False)
    np.testing.assert_allclose(np.asarray(y), np.asarray(y_ref),
                               atol=5e-2, rtol=5e-2)
    print("KERNEL_OK")
</pallas_src>

<mosaic_0001>
module attributes {stable_mosaic.version = 11 : i64} {
  func.func @kernel(%arg0: i32, %arg1: memref<1x256x36xbf16, #tpu.memory_space<vmem>>, %arg2: memref<36x16xbf16, #tpu.memory_space<vmem>>, %arg3: memref<1x16xf32, #tpu.memory_space<vmem>>, %arg4: memref<144x128xbf16, #tpu.memory_space<vmem>>, %arg5: memref<1x128xf32, #tpu.memory_space<vmem>>, %arg6: memref<1x16x128xf32, #tpu.memory_space<vmem>>) attributes {dimension_semantics = [#tpu.dimension_semantics<parallel>], iteration_bounds = array<i64: 2>, scalar_prefetch = 0 : i64, scratch_operands = 0 : i64, tpu.core_type = #tpu.core_type<tc>, window_params = [{transform_indices = @transform_0, window_bounds = array<i64: 1, 256, 36>}, {pipeline_mode = #tpu.pipeline_mode<synchronous>, transform_indices = @transform_1, window_bounds = array<i64: 36, 16>}, {pipeline_mode = #tpu.pipeline_mode<synchronous>, transform_indices = @transform_2, window_bounds = array<i64: 1, 16>}, {pipeline_mode = #tpu.pipeline_mode<synchronous>, transform_indices = @transform_3, window_bounds = array<i64: 144, 128>}, {pipeline_mode = #tpu.pipeline_mode<synchronous>, transform_indices = @transform_4, window_bounds = array<i64: 1, 128>}, {transform_indices = @transform_5, window_bounds = array<i64: 1, 16, 128>}]} {
    %c0 = arith.constant 0 : index
    %c0_0 = arith.constant 0 : index
    %c0_1 = arith.constant 0 : index
    %0 = vector.load %arg1[%c0, %c0_0, %c0_1] : memref<1x256x36xbf16, #tpu.memory_space<vmem>>, vector<1x256x36xbf16>
    %1 = vector.shape_cast %0 : vector<1x256x36xbf16> to vector<256x36xbf16>
    %c0_2 = arith.constant 0 : index
    %c0_3 = arith.constant 0 : index
    %2 = vector.load %arg2[%c0_2, %c0_3] : memref<36x16xbf16, #tpu.memory_space<vmem>>, vector<36x16xbf16>
    %cst = arith.constant dense<0.000000e+00> : vector<256x16xf32>
    %3 = tpu.matmul %1, %2, %cst {dimension_numbers = #tpu.dot_dimension_numbers<[1], [0], [0], [1], [0, 0, 1, 1], [], []>} : vector<256x36xbf16>, vector<36x16xbf16>, vector<256x16xf32> -> vector<256x16xf32>
    %c0_4 = arith.constant 0 : index
    %c0_5 = arith.constant 0 : index
    %4 = vector.load %arg3[%c0_4, %c0_5] : memref<1x16xf32, #tpu.memory_space<vmem>>, vector<1x16xf32>
    %5 = vector.broadcast %4 : vector<1x16xf32> to vector<256x16xf32>
    %6 = arith.addf %3, %5 : vector<256x16xf32>
    %cst_6 = arith.constant 5.000000e-01 : f32
    %7 = vector.broadcast %cst_6 : f32 to vector<256x16xf32>
    %8 = arith.mulf %7, %6 : vector<256x16xf32>
    %cst_7 = arith.constant 0.707106769 : f32
    %9 = vector.broadcast %cst_7 : f32 to vector<256x16xf32>
    %10 = arith.mulf %6, %9 : vector<256x16xf32>
    %11 = math.absf %10 : vector<256x16xf32>
    %cst_8 = arith.constant 0.327591091 : f32
    %12 = vector.broadcast %cst_8 : f32 to vector<256x16xf32>
    %13 = arith.mulf %12, %11 : vector<256x16xf32>
    %cst_9 = arith.constant 1.000000e+00 : f32
    %14 = vector.broadcast %cst_9 : f32 to vector<256x16xf32>
    %15 = arith.addf %14, %13 : vector<256x16xf32>
    %cst_10 = arith.constant 1.000000e+00 : f32
    %16 = vector.broadcast %cst_10 : f32 to vector<256x16xf32>
    %17 = arith.divf %16, %15 : vector<256x16xf32>
    %cst_11 = arith.constant 1.06140542 : f32
    %18 = vector.broadcast %cst_11 : f32 to vector<256x16xf32>
    %19 = arith.mulf %18, %17 : vector<256x16xf32>
    %cst_12 = arith.constant -1.45315206 : f32
    %20 = vector.broadcast %cst_12 : f32 to vector<256x16xf32>
    %21 = arith.addf %19, %20 : vector<256x16xf32>
    %22 = arith.mulf %21, %17 : vector<256x16xf32>
    %cst_13 = arith.constant 1.42141378 : f32
    %23 = vector.broadcast %cst_13 : f32 to vector<256x16xf32>
    %24 = arith.addf %22, %23 : vector<256x16xf32>
    %25 = arith.mulf %24, %17 : vector<256x16xf32>
    %cst_14 = arith.constant -0.284496725 : f32
    %26 = vector.broadcast %cst_14 : f32 to vector<256x16xf32>
    %27 = arith.addf %25, %26 : vector<256x16xf32>
    %28 = arith.mulf %27, %17 : vector<256x16xf32>
    %cst_15 = arith.constant 0.254829586 : f32
    %29 = vector.broadcast %cst_15 : f32 to vector<256x16xf32>
    %30 = arith.addf %28, %29 : vector<256x16xf32>
    %31 = arith.mulf %30, %17 : vector<256x16xf32>
    %cst_16 = arith.constant 0.000000e+00 : f32
    %32 = vector.broadcast %cst_16 : f32 to vector<256x16xf32>
    %33 = arith.subf %32, %11 : vector<256x16xf32>
    %34 = arith.mulf %33, %11 : vector<256x16xf32>
    %35 = math.exp %34 : vector<256x16xf32>
    %36 = arith.mulf %31, %35 : vector<256x16xf32>
    %cst_17 = arith.constant 1.000000e+00 : f32
    %37 = vector.broadcast %cst_17 : f32 to vector<256x16xf32>
    %38 = arith.subf %37, %36 : vector<256x16xf32>
    %cst_18 = arith.constant 0.000000e+00 : f32
    %39 = vector.broadcast %cst_18 : f32 to vector<256x16xf32>
    %40 = arith.cmpf olt, %10, %39 : vector<256x16xf32>
    %cst_19 = arith.constant 0.000000e+00 : f32
    %41 = vector.broadcast %cst_19 : f32 to vector<256x16xf32>
    %42 = arith.subf %41, %38 : vector<256x16xf32>
    %43 = arith.select %40, %42, %38 : vector<256x16xi1>, vector<256x16xf32>
    %cst_20 = arith.constant 1.000000e+00 : f32
    %44 = vector.broadcast %cst_20 : f32 to vector<256x16xf32>
    %45 = arith.addf %44, %43 : vector<256x16xf32>
    %46 = arith.mulf %8, %45 : vector<256x16xf32>
    %47 = vector.extract_strided_slice %46 {offsets = [0, 0], sizes = [64, 16], strides = [1, 1]} : vector<256x16xf32> to vector<64x16xf32>
    %48 = vector.extract_strided_slice %46 {offsets = [64, 0], sizes = [64, 16], strides = [1, 1]} : vector<256x16xf32> to vector<64x16xf32>
    %49 = arith.maximumf %47, %48 : vector<64x16xf32>
    %50 = vector.extract_strided_slice %46 {offsets = [128, 0], sizes = [64, 16], strides = [1, 1]} : vector<256x16xf32> to vector<64x16xf32>
    %51 = vector.extract_strided_slice %46 {offsets = [192, 0], sizes = [64, 16], strides = [1, 1]} : vector<256x16xf32> to vector<64x16xf32>
    %52 = arith.maximumf %50, %51 : vector<64x16xf32>
    %53 = arith.maximumf %49, %52 : vector<64x16xf32>
    %54 = arith.truncf %53 : vector<64x16xf32> to vector<64x16xbf16>
    %cst_21 = arith.constant 0.000000e+00 : bf16
    %55 = vector.broadcast %cst_21 : bf16 to vector<9x16xbf16>
    %56 = tpu.concatenate %55, %54, %55 in 0 : vector<9x16xbf16>, vector<64x16xbf16>, vector<9x16xbf16> -> vector<82x16xbf16>
    %57 = tpu.iota {dimensions = array<i32: 0>} : vector<64x16xi32>
    %c8_i32 = arith.constant 8 : i32
    %c0_i32 = arith.constant 0 : i32
    %58 = arith.cmpi eq, %c8_i32, %c0_i32 : i32
    %c1_i32 = arith.constant 1 : i32
    %59 = arith.select %58, %c1_i32, %c8_i32 : i32
    %60 = vector.broadcast %59 : i32 to vector<64x16xi32>
    %61 = arith.remsi %57, %60 : vector<64x16xi32>
    %c0_i32_22 = arith.constant 0 : i32
    %62 = vector.broadcast %c0_i32_22 : i32 to vector<64x16xi32>
    %63 = arith.cmpi ne, %61, %62 : vector<64x16xi32>
    %c0_i32_23 = arith.constant 0 : i32
    %64 = vector.broadcast %c0_i32_23 : i32 to vector<64x16xi32>
    %65 = arith.cmpi slt, %61, %64 : vector<64x16xi32>
    %c0_i32_24 = arith.constant 0 : i32
    %66 = arith.cmpi slt, %59, %c0_i32_24 : i32
    %67 = vector.broadcast %66 : i1 to vector<64x16xi1>
    %68 = vector.broadcast %67 : vector<64x16xi1> to vector<64x16xi1>
    %69 = arith.xori %65, %68 : vector<64x16xi1>
    %70 = arith.andi %69, %63 : vector<64x16xi1>
    %71 = vector.broadcast %59 : i32 to vector<64x16xi32>
    %72 = arith.addi %61, %71 : vector<64x16xi32>
    %73 = arith.select %70, %72, %61 : vector<64x16xi1>, vector<64x16xi32>
    %c1_i32_25 = arith.constant 1 : i32
    %74 = vector.broadcast %c1_i32_25 : i32 to vector<64x16xi32>
    %75 = arith.cmpi sge, %73, %74 : vector<64x16xi32>
    %c6_i32 = arith.constant 6 : i32
    %76 = vector.broadcast %c6_i32 : i32 to vector<64x16xi32>
    %77 = arith.cmpi sle, %73, %76 : vector<64x16xi32>
    %78 = vector.extract_strided_slice %56 {offsets = [0, 0], sizes = [64, 16], strides = [1, 1]} : vector<82x16xbf16> to vector<64x16xbf16>
    %cst_26 = arith.constant 0.000000e+00 : bf16
    %79 = vector.broadcast %cst_26 : bf16 to vector<64x16xbf16>
    %80 = arith.select %75, %78, %79 : vector<64x16xi1>, vector<64x16xbf16>
    %81 = vector.extract_strided_slice %56 {offsets = [1, 0], sizes = [64, 16], strides = [1, 1]} : vector<82x16xbf16> to vector<64x16xbf16>
    %82 = vector.extract_strided_slice %56 {offsets = [2, 0], sizes = [64, 16], strides = [1, 1]} : vector<82x16xbf16> to vector<64x16xbf16>
    %cst_27 = arith.constant 0.000000e+00 : bf16
    %83 = vector.broadcast %cst_27 : bf16 to vector<64x16xbf16>
    %84 = arith.select %77, %82, %83 : vector<64x16xi1>, vector<64x16xbf16>
    %85 = vector.extract_strided_slice %56 {offsets = [8, 0], sizes = [64, 16], strides = [1, 1]} : vector<82x16xbf16> to vector<64x16xbf16>
    %cst_28 = arith.constant 0.000000e+00 : bf16
    %86 = vector.broadcast %cst_28 : bf16 to vector<64x16xbf16>
    %87 = arith.select %75, %85, %86 : vector<64x16xi1>, vector<64x16xbf16>
    %88 = vector.extract_strided_slice %56 {offsets = [9, 0], sizes = [64, 16], strides = [1, 1]} : vector<82x16xbf16> to vector<64x16xbf16>
    %89 = vector.extract_strided_slice %56 {offsets = [10, 0], sizes = [64, 16], strides = [1, 1]} : vector<82x16xbf16> to vector<64x16xbf16>
    %cst_29 = arith.constant 0.000000e+00 : bf16
    %90 = vector.broadcast %cst_29 : bf16 to vector<64x16xbf16>
    %91 = arith.select %77, %89, %90 : vector<64x16xi1>, vector<64x16xbf16>
    %92 = vector.extract_strided_slice %56 {offsets = [16, 0], sizes = [64, 16], strides = [1, 1]} : vector<82x16xbf16> to vector<64x16xbf16>
    %cst_30 = arith.constant 0.000000e+00 : bf16
    %93 = vector.broadcast %cst_30 : bf16 to vector<64x16xbf16>
    %94 = arith.select %75, %92, %93 : vector<64x16xi1>, vector<64x16xbf16>
    %95 = vector.extract_strided_slice %56 {offsets = [17, 0], sizes = [64, 16], strides = [1, 1]} : vector<82x16xbf16> to vector<64x16xbf16>
    %96 = vector.extract_strided_slice %56 {offsets = [18, 0], sizes = [64, 16], strides = [1, 1]} : vector<82x16xbf16> to vector<64x16xbf16>
    %cst_31 = arith.constant 0.000000e+00 : bf16
    %97 = vector.broadcast %cst_31 : bf16 to vector<64x16xbf16>
    %98 = arith.select %77, %96, %97 : vector<64x16xi1>, vector<64x16xbf16>
    %99 = tpu.concatenate %80, %81, %84, %87, %88, %91, %94, %95, %98 in 1 : vector<64x16xbf16>, vector<64x16xbf16>, vector<64x16xbf16>, vector<64x16xbf16>, vector<64x16xbf16>, vector<64x16xbf16>, vector<64x16xbf16>, vector<64x16xbf16>, vector<64x16xbf16> -> vector<64x144xbf16>
    %c0_32 = arith.constant 0 : index
    %c0_33 = arith.constant 0 : index
    %100 = vector.load %arg4[%c0_32, %c0_33] : memref<144x128xbf16, #tpu.memory_space<vmem>>, vector<144x128xbf16>
    %cst_34 = arith.constant dense<0.000000e+00> : vector<64x128xf32>
    %101 = tpu.matmul %99, %100, %cst_34 {dimension_numbers = #tpu.dot_dimension_numbers<[1], [0], [0], [1], [0, 0, 1, 1], [], []>} : vector<64x144xbf16>, vector<144x128xbf16>, vector<64x128xf32> -> vector<64x128xf32>
    %c0_35 = arith.constant 0 : index
    %c0_36 = arith.constant 0 : index
    %102 = vector.load %arg5[%c0_35, %c0_36] : memref<1x128xf32, #tpu.memory_space<vmem>>, vector<1x128xf32>
    %103 = vector.broadcast %102 : vector<1x128xf32> to vector<64x128xf32>
    %104 = arith.addf %101, %103 : vector<64x128xf32>
    %cst_37 = arith.constant 5.000000e-01 : f32
    %105 = vector.broadcast %cst_37 : f32 to vector<64x128xf32>
    %106 = arith.mulf %105, %104 : vector<64x128xf32>
    %cst_38 = arith.constant 0.707106769 : f32
    %107 = vector.broadcast %cst_38 : f32 to vector<64x128xf32>
    %108 = arith.mulf %104, %107 : vector<64x128xf32>
    %109 = math.absf %108 : vector<64x128xf32>
    %cst_39 = arith.constant 0.327591091 : f32
    %110 = vector.broadcast %cst_39 : f32 to vector<64x128xf32>
    %111 = arith.mulf %110, %109 : vector<64x128xf32>
    %cst_40 = arith.constant 1.000000e+00 : f32
    %112 = vector.broadcast %cst_40 : f32 to vector<64x128xf32>
    %113 = arith.addf %112, %111 : vector<64x128xf32>
    %cst_41 = arith.constant 1.000000e+00 : f32
    %114 = vector.broadcast %cst_41 : f32 to vector<64x128xf32>
    %115 = arith.divf %114, %113 : vector<64x128xf32>
    %cst_42 = arith.constant 1.06140542 : f32
    %116 = vector.broadcast %cst_42 : f32 to vector<64x128xf32>
    %117 = arith.mulf %116, %115 : vector<64x128xf32>
    %cst_43 = arith.constant -1.45315206 : f32
    %118 = vector.broadcast %cst_43 : f32 to vector<64x128xf32>
    %119 = arith.addf %117, %118 : vector<64x128xf32>
    %120 = arith.mulf %119, %115 : vector<64x128xf32>
    %cst_44 = arith.constant 1.42141378 : f32
    %121 = vector.broadcast %cst_44 : f32 to vector<64x128xf32>
    %122 = arith.addf %120, %121 : vector<64x128xf32>
    %123 = arith.mulf %122, %115 : vector<64x128xf32>
    %cst_45 = arith.constant -0.284496725 : f32
    %124 = vector.broadcast %cst_45 : f32 to vector<64x128xf32>
    %125 = arith.addf %123, %124 : vector<64x128xf32>
    %126 = arith.mulf %125, %115 : vector<64x128xf32>
    %cst_46 = arith.constant 0.254829586 : f32
    %127 = vector.broadcast %cst_46 : f32 to vector<64x128xf32>
    %128 = arith.addf %126, %127 : vector<64x128xf32>
    %129 = arith.mulf %128, %115 : vector<64x128xf32>
    %cst_47 = arith.constant 0.000000e+00 : f32
    %130 = vector.broadcast %cst_47 : f32 to vector<64x128xf32>
    %131 = arith.subf %130, %109 : vector<64x128xf32>
    %132 = arith.mulf %131, %109 : vector<64x128xf32>
    %133 = math.exp %132 : vector<64x128xf32>
    %134 = arith.mulf %129, %133 : vector<64x128xf32>
    %cst_48 = arith.constant 1.000000e+00 : f32
    %135 = vector.broadcast %cst_48 : f32 to vector<64x128xf32>
    %136 = arith.subf %135, %134 : vector<64x128xf32>
    %cst_49 = arith.constant 0.000000e+00 : f32
    %137 = vector.broadcast %cst_49 : f32 to vector<64x128xf32>
    %138 = arith.cmpf olt, %108, %137 : vector<64x128xf32>
    %cst_50 = arith.constant 0.000000e+00 : f32
    %139 = vector.broadcast %cst_50 : f32 to vector<64x128xf32>
    %140 = arith.subf %139, %136 : vector<64x128xf32>
    %141 = arith.select %138, %140, %136 : vector<64x128xi1>, vector<64x128xf32>
    %cst_51 = arith.constant 1.000000e+00 : f32
    %142 = vector.broadcast %cst_51 : f32 to vector<64x128xf32>
    %143 = arith.addf %142, %141 : vector<64x128xf32>
    %144 = arith.mulf %106, %143 : vector<64x128xf32>
    %145 = vector.extract_strided_slice %144 {offsets = [0, 0], sizes = [8, 128], strides = [1, 1]} : vector<64x128xf32> to vector<8x128xf32>
    %146 = vector.extract_strided_slice %144 {offsets = [8, 0], sizes = [8, 128], strides = [1, 1]} : vector<64x128xf32> to vector<8x128xf32>
    %147 = arith.maximumf %145, %146 : vector<8x128xf32>
    %148 = vector.extract_strided_slice %147 {offsets = [0, 0], sizes = [1, 128], strides = [1, 1]} : vector<8x128xf32> to vector<1x128xf32>
    %149 = vector.extract_strided_slice %147 {offsets = [1, 0], sizes = [1, 128], strides = [1, 1]} : vector<8x128xf32> to vector<1x128xf32>
    %150 = arith.maximumf %148, %149 : vector<1x128xf32>
    %151 = vector.extract_strided_slice %147 {offsets = [2, 0], sizes = [1, 128], strides = [1, 1]} : vector<8x128xf32> to vector<1x128xf32>
    %152 = vector.extract_strided_slice %147 {offsets = [3, 0], sizes = [1, 128], strides = [1, 1]} : vector<8x128xf32> to vector<1x128xf32>
    %153 = arith.maximumf %151, %152 : vector<1x128xf32>
    %154 = vector.extract_strided_slice %147 {offsets = [4, 0], sizes = [1, 128], strides = [1, 1]} : vector<8x128xf32> to vector<1x128xf32>
    %155 = vector.extract_strided_slice %147 {offsets = [5, 0], sizes = [1, 128], strides = [1, 1]} : vector<8x128xf32> to vector<1x128xf32>
    %156 = arith.maximumf %154, %155 : vector<1x128xf32>
    %157 = vector.extract_strided_slice %147 {offsets = [6, 0], sizes = [1, 128], strides = [1, 1]} : vector<8x128xf32> to vector<1x128xf32>
    %158 = vector.extract_strided_slice %147 {offsets = [7, 0], sizes = [1, 128], strides = [1, 1]} : vector<8x128xf32> to vector<1x128xf32>
    %159 = arith.maximumf %157, %158 : vector<1x128xf32>
    %160 = vector.extract_strided_slice %144 {offsets = [16, 0], sizes = [8, 128], strides = [1, 1]} : vector<64x128xf32> to vector<8x128xf32>
    %161 = vector.extract_strided_slice %144 {offsets = [24, 0], sizes = [8, 128], strides = [1, 1]} : vector<64x128xf32> to vector<8x128xf32>
    %162 = arith.maximumf %160, %161 : vector<8x128xf32>
    %163 = vector.extract_strided_slice %162 {offsets = [0, 0], sizes = [1, 128], strides = [1, 1]} : vector<8x128xf32> to vector<1x128xf32>
    %164 = vector.extract_strided_slice %162 {offsets = [1, 0], sizes = [1, 128], strides = [1, 1]} : vector<8x128xf32> to vector<1x128xf32>
    %165 = arith.maximumf %163, %164 : vector<1x128xf32>
    %166 = vector.extract_strided_slice %162 {offsets = [2, 0], sizes = [1, 128], strides = [1, 1]} : vector<8x128xf32> to vector<1x128xf32>
    %167 = vector.extract_strided_slice %162 {offsets = [3, 0], sizes = [1, 128], strides = [1, 1]} : vector<8x128xf32> to vector<1x128xf32>
    %168 = arith.maximumf %166, %167 : vector<1x128xf32>
    %169 = vector.extract_strided_slice %162 {offsets = [4, 0], sizes = [1, 128], strides = [1, 1]} : vector<8x128xf32> to vector<1x128xf32>
    %170 = vector.extract_strided_slice %162 {offsets = [5, 0], sizes = [1, 128], strides = [1, 1]} : vector<8x128xf32> to vector<1x128xf32>
    %171 = arith.maximumf %169, %170 : vector<1x128xf32>
    %172 = vector.extract_strided_slice %162 {offsets = [6, 0], sizes = [1, 128], strides = [1, 1]} : vector<8x128xf32> to vector<1x128xf32>
    %173 = vector.extract_strided_slice %162 {offsets = [7, 0], sizes = [1, 128], strides = [1, 1]} : vector<8x128xf32> to vector<1x128xf32>
    %174 = arith.maximumf %172, %173 : vector<1x128xf32>
    %175 = vector.extract_strided_slice %144 {offsets = [32, 0], sizes = [8, 128], strides = [1, 1]} : vector<64x128xf32> to vector<8x128xf32>
    %176 = vector.extract_strided_slice %144 {offsets = [40, 0], sizes = [8, 128], strides = [1, 1]} : vector<64x128xf32> to vector<8x128xf32>
    %177 = arith.maximumf %175, %176 : vector<8x128xf32>
    %178 = vector.extract_strided_slice %177 {offsets = [0, 0], sizes = [1, 128], strides = [1, 1]} : vector<8x128xf32> to vector<1x128xf32>
    %179 = vector.extract_strided_slice %177 {offsets = [1, 0], sizes = [1, 128], strides = [1, 1]} : vector<8x128xf32> to vector<1x128xf32>
    %180 = arith.maximumf %178, %179 : vector<1x128xf32>
    %181 = vector.extract_strided_slice %177 {offsets = [2, 0], sizes = [1, 128], strides = [1, 1]} : vector<8x128xf32> to vector<1x128xf32>
    %182 = vector.extract_strided_slice %177 {offsets = [3, 0], sizes = [1, 128], strides = [1, 1]} : vector<8x128xf32> to vector<1x128xf32>
    %183 = arith.maximumf %181, %182 : vector<1x128xf32>
    %184 = vector.extract_strided_slice %177 {offsets = [4, 0], sizes = [1, 128], strides = [1, 1]} : vector<8x128xf32> to vector<1x128xf32>
    %185 = vector.extract_strided_slice %177 {offsets = [5, 0], sizes = [1, 128], strides = [1, 1]} : vector<8x128xf32> to vector<1x128xf32>
    %186 = arith.maximumf %184, %185 : vector<1x128xf32>
    %187 = vector.extract_strided_slice %177 {offsets = [6, 0], sizes = [1, 128], strides = [1, 1]} : vector<8x128xf32> to vector<1x128xf32>
    %188 = vector.extract_strided_slice %177 {offsets = [7, 0], sizes = [1, 128], strides = [1, 1]} : vector<8x128xf32> to vector<1x128xf32>
    %189 = arith.maximumf %187, %188 : vector<1x128xf32>
    %190 = vector.extract_strided_slice %144 {offsets = [48, 0], sizes = [8, 128], strides = [1, 1]} : vector<64x128xf32> to vector<8x128xf32>
    %191 = vector.extract_strided_slice %144 {offsets = [56, 0], sizes = [8, 128], strides = [1, 1]} : vector<64x128xf32> to vector<8x128xf32>
    %192 = arith.maximumf %190, %191 : vector<8x128xf32>
    %193 = vector.extract_strided_slice %192 {offsets = [0, 0], sizes = [1, 128], strides = [1, 1]} : vector<8x128xf32> to vector<1x128xf32>
    %194 = vector.extract_strided_slice %192 {offsets = [1, 0], sizes = [1, 128], strides = [1, 1]} : vector<8x128xf32> to vector<1x128xf32>
    %195 = arith.maximumf %193, %194 : vector<1x128xf32>
    %196 = vector.extract_strided_slice %192 {offsets = [2, 0], sizes = [1, 128], strides = [1, 1]} : vector<8x128xf32> to vector<1x128xf32>
    %197 = vector.extract_strided_slice %192 {offsets = [3, 0], sizes = [1, 128], strides = [1, 1]} : vector<8x128xf32> to vector<1x128xf32>
    %198 = arith.maximumf %196, %197 : vector<1x128xf32>
    %199 = vector.extract_strided_slice %192 {offsets = [4, 0], sizes = [1, 128], strides = [1, 1]} : vector<8x128xf32> to vector<1x128xf32>
    %200 = vector.extract_strided_slice %192 {offsets = [5, 0], sizes = [1, 128], strides = [1, 1]} : vector<8x128xf32> to vector<1x128xf32>
    %201 = arith.maximumf %199, %200 : vector<1x128xf32>
    %202 = vector.extract_strided_slice %192 {offsets = [6, 0], sizes = [1, 128], strides = [1, 1]} : vector<8x128xf32> to vector<1x128xf32>
    %203 = vector.extract_strided_slice %192 {offsets = [7, 0], sizes = [1, 128], strides = [1, 1]} : vector<8x128xf32> to vector<1x128xf32>
    %204 = arith.maximumf %202, %203 : vector<1x128xf32>
    %205 = tpu.concatenate %150, %153, %156, %159, %165, %168, %171, %174, %180, %183, %186, %189, %195, %198, %201, %204 in 0 : vector<1x128xf32>, vector<1x128xf32>, vector<1x128xf32>, vector<1x128xf32>, vector<1x128xf32>, vector<1x128xf32>, vector<1x128xf32>, vector<1x128xf32>, vector<1x128xf32>, vector<1x128xf32>, vector<1x128xf32>, vector<1x128xf32>, vector<1x128xf32>, vector<1x128xf32>, vector<1x128xf32>, vector<1x128xf32> -> vector<16x128xf32>
    %c0_52 = arith.constant 0 : index
    %c0_53 = arith.constant 0 : index
    %c0_54 = arith.constant 0 : index
    %206 = vector.load %arg6[%c0_52, %c0_53, %c0_54] : memref<1x16x128xf32, #tpu.memory_space<vmem>>, vector<1x16x128xf32>
    %207 = vector.shape_cast %206 : vector<1x16x128xf32> to vector<16x128xf32>
    %208 = vector.shape_cast %205 : vector<16x128xf32> to vector<1x16x128xf32>
    tpu.vector_store %arg6[%c0_52, %c0_53, %c0_54], %208 {strides = array<i32>} : memref<1x16x128xf32, #tpu.memory_space<vmem>>, vector<1x16x128xf32>,
    return
  }
  func.func @transform_0(%arg0: i32) -> (i32, i32, i32) {
    %c0_i32 = arith.constant 0 : i32
    %c0_i32_0 = arith.constant 0 : i32
    %c0_i32_1 = arith.constant 0 : i32
    return %arg0, %c0_i32, %c0_i32_0 : i32, i32, i32
  }
  func.func @transform_1(%arg0: i32) -> (i32, i32) {
    %c0_i32 = arith.constant 0 : i32
    %c0_i32_0 = arith.constant 0 : i32
    %c0_i32_1 = arith.constant 0 : i32
    return %c0_i32, %c0_i32_0 : i32, i32
  }
  func.func @transform_2(%arg0: i32) -> (i32, i32) {
    %c0_i32 = arith.constant 0 : i32
    %c0_i32_0 = arith.constant 0 : i32
    %c0_i32_1 = arith.constant 0 : i32
    return %c0_i32, %c0_i32_0 : i32, i32
  }
  func.func @transform_3(%arg0: i32) -> (i32, i32) {
    %c0_i32 = arith.constant 0 : i32
    %c0_i32_0 = arith.constant 0 : i32
    %c0_i32_1 = arith.constant 0 : i32
    return %c0_i32, %c0_i32_0 : i32, i32
  }
  func.func @transform_4(%arg0: i32) -> (i32, i32) {
    %c0_i32 = arith.constant 0 : i32
    %c0_i32_0 = arith.constant 0 : i32
    %c0_i32_1 = arith.constant 0 : i32
    return %c0_i32, %c0_i32_0 : i32, i32
  }
  func.func @transform_5(%arg0: i32) -> (i32, i32, i32) {
    %c0_i32 = arith.constant 0 : i32
    %c0_i32_0 = arith.constant 0 : i32
    %c0_i32_1 = arith.constant 0 : i32
    return %arg0, %c0_i32, %c0_i32_0 : i32, i32, i32
  }
}

</mosaic_0001>

<llo_original>
// kernel: convdown_forward.1
$region0: #{convdown_forward.1}
  #allocation0 [shape = 'u32[]', space=smem, size = 0x4, offset = 0x4, fixed_abs, tag = 'smem constant byte address 0x4 - core index']
  #allocation1 [shape = 'u32[144,128]{1,0:T(1,128)}', space=vmem, size = 0x12000, scoped, tag = 'internal scratch']
  %s0 = inlined_call_operand.vmem [shape: bf16[2,256,36], index: 0, kind: input, shape index: {}]
  %s1 = inlined_call_operand.vmem [shape: bf16[36,16], index: 1, kind: input, shape index: {}]
  %s2 = inlined_call_operand.vmem [shape: f32[1,16], index: 2, kind: input, shape index: {}]
  %s3 = inlined_call_operand.vmem [shape: bf16[144,128], index: 3, kind: input, shape index: {}]
  %s4 = inlined_call_operand.vmem [shape: f32[1,128], index: 4, kind: input, shape index: {}]
  %s5 = inlined_call_operand.hbm [shape: f32[2,16,128], index: 5, kind: output, shape index: {}]
  %s6 = sld [smem:[#allocation0]]
  $region53: #{convdown_forward.1} parent=0
    _
  %s8 = ssub.s32 1, %s6
  %s9 = scalar_select 0, %s8, %s6
  $region1: #{convdown_forward.1} parent=0
    #allocation2 [shape = 'u8[16384]{0}', space=vmem, size = 0x4000, scoped, tag = 'output window, operand 0']
    #allocation3 [shape = 's32[2]{0}', space=sflag, size = 0x8, scoped, tag = 'scoped memory for convdown_forward.1']
    %10 = vsyncpa [#allocation3], 0
    %s11 = scalar_lea.sflag [#allocation3], 1
    %12 = vsyncpa %s11, 0
    loop: start=0, step=1, limit=4
    $region2: #{convdown_forward.1} parent=1 // loop_pre_header
      _
    $region3: #{convdown_forward.1} parent=1 // loop_header
      %s14 = sphi 0, %s18
      %p15 = scmp.ge.s32.totalorder %s14, 4
      %s24 = sphi 0, %s26
      %s27 = sphi 0, %s24
      %s28 = sphi 0, %s27
      %s44 = sphi 0, %s28
      %s48 = sphi 0, %s48
      %s50 = sphi 0, %s48
      %s51 = sphi 0, %s50
      %s65 = sphi 0, %s51
      %s69 = sphi 0, %s69
      %s71 = sphi 0, %s69
      %s72 = sphi 0, %s71
      %s86 = sphi 0, %s72
      %s90 = sphi 0, %s90
      %s92 = sphi 0, %s90
      %s93 = sphi 0, %s92
      %s107 = sphi 0, %s93
      %s111 = sphi 0, %s111
      %s113 = sphi 0, %s111
      %s114 = sphi 0, %s113
      %s128 = sphi 0, %s114
      %s134 = sphi 0, %s136
      %s137 = sphi 0, %s134
      %s138 = sphi 0, %s137
      %s154 = sphi 0, %s138
    $region4: #{convdown_forward.1} parent=1 // loop_header_branch
      %17 = sbr.rel (%p15) target = $region8
    $region5: #{convdown_forward.1} parent=1 // loop_body
      %s19 = ssub.s32 %s14, 1
      %s20 = ssub.s32 %s14, 2
      %s21 = sadd.s32 %s14, 1
      %s22 = ssub.s32 %s14, %s21
      %p23 = scmp.eq.s32.totalorder %s22, 0
      %s25 = sadd.s32 %s24, 1
      %s26 = scalar_select %p23, %s24, %s25
      %p29 = pneg %p23
      %p30 = scmp.eq.s32.totalorder %s14, 1
      %p31 = por %p29, %p30
      %p32 = scmp.ne.s32.totalorder %s24, %s27
      %p33 = scmp.eq.s32.totalorder %s14, 0
      %p34 = por %p32, %p33
      %p35 = scmp.ne.s32.totalorder %s24, %s27
      %p36 = scmp.eq.s32.totalorder %s19, 1
      %p37 = por %p35, %p36
      %p38 = scmp.ne.s32.totalorder %s27, %s28
      %p39 = scmp.eq.s32.totalorder %s19, 0
      %p40 = por %p38, %p39
      %p41 = scmp.ne.s32.totalorder %s27, %s28
      %p42 = scmp.eq.s32.totalorder %s20, 1
      %p43 = por %p41, %p42
      %p45 = scmp.ne.s32.totalorder %s28, %s44
      %p46 = scmp.eq.s32.totalorder %s20, 0
      %p47 = por %p45, %p46
      %s49 = sadd.s32 %s48, 1
      %p52 = scmp.eq.s32.totalorder %s14, 1
      %p53 = scmp.ne.s32.totalorder %s48, %s50
      %p54 = scmp.eq.s32.totalorder %s14, 0
      %p55 = por %p53, %p54
      %p56 = scmp.ne.s32.totalorder %s48, %s50
      %p57 = scmp.eq.s32.totalorder %s19, 1
      %p58 = por %p56, %p57
      %p59 = scmp.ne.s32.totalorder %s50, %s51
      %p60 = scmp.eq.s32.totalorder %s19, 0
      %p61 = por %p59, %p60
      %p62 = scmp.ne.s32.totalorder %s50, %s51
      %p63 = scmp.eq.s32.totalorder %s20, 1
      %p64 = por %p62, %p63
      %p66 = scmp.ne.s32.totalorder %s51, %s65
      %p67 = scmp.eq.s32.totalorder %s20, 0
      %p68 = por %p66, %p67
      %s70 = sadd.s32 %s69, 1
      %p73 = scmp.eq.s32.totalorder %s14, 1
      %p74 = scmp.ne.s32.totalorder %s69, %s71
      %p75 = scmp.eq.s32.totalorder %s14, 0
      %p76 = por %p74, %p75
      %p77 = scmp.ne.s32.totalorder %s69, %s71
      %p78 = scmp.eq.s32.totalorder %s19, 1
      %p79 = por %p77, %p78
      %p80 = scmp.ne.s32.totalorder %s71, %s72
      %p81 = scmp.eq.s32.totalorder %s19, 0
      %p82 = por %p80, %p81
      %p83 = scmp.ne.s32.totalorder %s71, %s72
      %p84 = scmp.eq.s32.totalorder %s20, 1
      %p85 = por %p83, %p84
      %p87 = scmp.ne.s32.totalorder %s72, %s86
      %p88 = scmp.eq.s32.totalorder %s20, 0
      %p89 = por %p87, %p88
      %s91 = sadd.s32 %s90, 1
      %p94 = scmp.eq.s32.totalorder %s14, 1
      %p95 = scmp.ne.s32.totalorder %s90, %s92
      %p96 = scmp.eq.s32.totalorder %s14, 0
      %p97 = por %p95, %p96
      %p98 = scmp.ne.s32.totalorder %s90, %s92
      %p99 = scmp.eq.s32.totalorder %s19, 1
      %p100 = por %p98, %p99
      %p101 = scmp.ne.s32.totalorder %s92, %s93
      %p102 = scmp.eq.s32.totalorder %s19, 0
      %p103 = por %p101, %p102
      %p104 = scmp.ne.s32.totalorder %s92, %s93
      %p105 = scmp.eq.s32.totalorder %s20, 1
      %p106 = por %p104, %p105
      %p108 = scmp.ne.s32.totalorder %s93, %s107
      %p109 = scmp.eq.s32.totalorder %s20, 0
      %p110 = por %p108, %p109
      %s112 = sadd.s32 %s111, 1
      %p115 = scmp.eq.s32.totalorder %s14, 1
      %p116 = scmp.ne.s32.totalorder %s111, %s113
      %p117 = scmp.eq.s32.totalorder %s14, 0
      %p118 = por %p116, %p117
      %p119 = scmp.ne.s32.totalorder %s111, %s113
      %p120 = scmp.eq.s32.totalorder %s19, 1
      %p121 = por %p119, %p120
      %p122 = scmp.ne.s32.totalorder %s113, %s114
      %p123 = scmp.eq.s32.totalorder %s19, 0
      %p124 = por %p122, %p123
      %p125 = scmp.ne.s32.totalorder %s113, %s114
      %p126 = scmp.eq.s32.totalorder %s20, 1
      %p127 = por %p125, %p126
      %p129 = scmp.ne.s32.totalorder %s114, %s128
      %p130 = scmp.eq.s32.totalorder %s20, 0
      %p131 = por %p129, %p130
      %s132 = ssub.s32 %s14, %s21
      %p133 = scmp.eq.s32.totalorder %s132, 0
      %s135 = sadd.s32 %s134, 1
      %s136 = scalar_select %p133, %s134, %s135
      %p139 = pneg %p133
      %p140 = scmp.eq.s32.totalorder %s14, 1
      %p141 = por %p139, %p140
      %p142 = scmp.ne.s32.totalorder %s134, %s137
      %p143 = scmp.eq.s32.totalorder %s14, 0
      %p144 = por %p142, %p143
      %p145 = scmp.ne.s32.totalorder %s134, %s137
      %p146 = scmp.eq.s32.totalorder %s19, 1
      %p147 = por %p145, %p146
      %p148 = scmp.ne.s32.totalorder %s137, %s138
      %p149 = scmp.eq.s32.totalorder %s19, 0
      %p150 = por %p148, %p149
      %p151 = scmp.ne.s32.totalorder %s137, %s138
      %p152 = scmp.eq.s32.totalorder %s20, 1
      %p153 = por %p151, %p152
      %p155 = scmp.ne.s32.totalorder %s138, %s154
      %p156 = scmp.eq.s32.totalorder %s20, 0
      %p157 = por %p155, %p156
      %p158 = scmp.le.s32.totalorder 1, %s14
      %p159 = scmp.lt.s32.totalorder %s14, 3
      %p160 = pnand %p158, %p159
      %p161 = pneg %p160
      // Predicated region
      $region9: #{convdown_forward.1} parent=5 // pred_check
        _
      $region10: #{convdown_forward.1} parent=5 // pred_check_branch
        %163 = sbr.rel (%p160) target = $region12
      $region11: #{convdown_forward.1} parent=5 // pred_region
        %s164 = ssub.s32 %s14, 1
        // Predicated region
        $region13: #{convdown_forward.1} parent=11 // pred_check
          %p165 = pneg %p61
        $region14: #{convdown_forward.1} parent=11 // pred_check_branch
          %167 = sbr.rel (%p165) target = $region16
        $region15: #{convdown_forward.1} parent=11 // pred_region
          _
        $region16: #{convdown_forward.1} parent=11 // pred_fallthru
          _
        // Predicated region
        $region17: #{convdown_forward.1} parent=11 // pred_check
          %p168 = pneg %p82
        $region18: #{convdown_forward.1} parent=11 // pred_check_branch
          %170 = sbr.rel (%p168) target = $region20
        $region19: #{convdown_forward.1} parent=11 // pred_region
          _
        $region20: #{convdown_forward.1} parent=11 // pred_fallthru
          _
        // Predicated region
        $region21: #{convdown_forward.1} parent=11 // pred_check
          %p171 = pneg %p103
        $region22: #{convdown_forward.1} parent=11 // pred_check_branch
          %173 = sbr.rel (%p171) target = $region24
        $region23: #{convdown_forward.1} parent=11 // pred_region
          _
        $region24: #{convdown_forward.1} parent=11 // pred_fallthru
          _
        // Predicated region
        $region25: #{convdown_forward.1} parent=11 // pred_check
          %p174 = pneg %p124
        $region26: #{convdown_forward.1} parent=11 // pred_check_branch
          %176 = sbr.rel (%p174) target = $region28
        $region27: #{convdown_forward.1} parent=11 // pred_region
          _
        $region28: #{convdown_forward.1} parent=11 // pred_fallthru
          _
      $region12: #{convdown_forward.1} parent=5 // pred_fallthru
        _
      %p177 = scmp.lt.s32.totalorder %s14, 2
      // Predicated region
      $region29: #{convdown_forward.1} parent=5 // pred_check
        %p178 = pneg %p177
      $region30: #{convdown_forward.1} parent=5 // pred_check_branch
        %180 = sbr.rel (%p178) target = $region32
      $region31: #{convdown_forward.1} parent=5 // pred_region
        // Predicated region
        $region33: #{convdown_forward.1} parent=31 // pred_check
          %p181 = pneg %p34
        $region34: #{convdown_forward.1} parent=31 // pred_check_branch
          %183 = sbr.rel (%p181) target = $region36
        $region35: #{convdown_forward.1} parent=31 // pred_region
          %p184 = scmp.lt.s32.totalorder %s14, 1
          %s185 = scalar_select %p184, %s14, 1
          %s186 = smul.addr %s185, 32
          %s187 = smul.addr %s186, 4
          %s188 = scalar_lea.vmem %s0, %s187
        $region36: #{convdown_forward.1} parent=31 // pred_fallthru
          _
      $region32: #{convdown_forward.1} parent=5 // pred_fallthru
        _
      %p189 = scmp.le.s32.totalorder 1, %s14
      %p190 = scmp.lt.s32.totalorder %s14, 3
      %p191 = pnand %p189, %p190
      %p192 = pneg %p191
      // Predicated region
      $region37: #{convdown_forward.1} parent=5 // pred_check
        _
      $region38: #{convdown_forward.1} parent=5 // pred_check_branch
        %194 = sbr.rel (%p191) target = $region40
      $region39: #{convdown_forward.1} parent=5 // pred_region
        %s195 = ssub.s32 %s14, 1
        %p196 = scmp.lt.s32.totalorder %s19, 1
        %s197 = scalar_select %p196, %s19, 1
        %s198 = smul.addr %s197, 32
        %s199 = smul.addr %s198, 4
        %s200 = scalar_lea.vmem %s0, %s199
        %p201 = pneg %p40
        %p202 = pneg %p37
        %p203 = pneg %p61
        %p204 = pneg %p58
        %p205 = pneg %p82
        %p206 = pneg %p79
        %p207 = pneg %p103
        %p208 = pneg %p100
        %p209 = pneg %p124
        %p210 = pneg %p121
        %p211 = pneg %p150
        %p212 = pneg %p147
        %s213 = sand.u32 %s137, 1
        %s214 = scalar_lea.sflag [#allocation3], %s213
        %s215 = sand.u32 %s137, 1
        %s216 = smul.addr %s215, 16
        %s217 = scalar_lea.vmem [#allocation2], %s216
        %p218 = scmp.lt.s32.totalorder %s19, 1
        %s219 = scalar_select %p218, %s19, 1
        %s220 = smul.addr %s219, 32
        %s221 = smul.addr %s220, 4
        %s222 = scalar_lea.vmem %s0, %s221
        %v226 = vld [vmem:[%s222] sm:$0xf]
        %v227 = vld [vmem:[%s222 + $0x4] sm:$0xf]
        %v228 = vld [vmem:[%s222 + $0x8] sm:$0xf]
        %v229 = vld [vmem:[%s222 + $0xc] sm:$0xf]
        %v230 = vld [vmem:[%s222 + $0x10] sm:$0xf]
        %v231 = vld [vmem:[%s222 + $0x14] sm:$0xf]
        %v232 = vld [vmem:[%s222 + $0x18] sm:$0xf]
        %v233 = vld [vmem:[%s222 + $0x1c] sm:$0xf]
        %v234 = vld [vmem:[%s222 + $0x20] sm:$0xf]
        %v235 = vld [vmem:[%s222 + $0x24] sm:$0xf]
        %v236 = vld [vmem:[%s222 + $0x28] sm:$0xf]
        %v237 = vld [vmem:[%s222 + $0x2c] sm:$0xf]
        %v238 = vld [vmem:[%s222 + $0x30] sm:$0xf]
        %v239 = vld [vmem:[%s222 + $0x34] sm:$0xf]
        %v240 = vld [vmem:[%s222 + $0x38] sm:$0xf]
        %v241 = vld [vmem:[%s222 + $0x3c] sm:$0xf]
        %v242 = vld [vmem:[%s222 + $0x40] sm:$0xf]
        %v243 = vld [vmem:[%s222 + $0x44] sm:$0xf]
        %v244 = vld [vmem:[%s222 + $0x48] sm:$0xf]
        %v245 = vld [vmem:[%s222 + $0x4c] sm:$0xf]
        %v246 = vld [vmem:[%s222 + $0x50] sm:$0xf]
        %v247 = vld [vmem:[%s222 + $0x54] sm:$0xf]
        %v248 = vld [vmem:[%s222 + $0x58] sm:$0xf]
        %v249 = vld [vmem:[%s222 + $0x5c] sm:$0xf]
        %v250 = vld [vmem:[%s222 + $0x60] sm:$0xf]
        %v251 = vld [vmem:[%s222 + $0x64] sm:$0xf]
        %v252 = vld [vmem:[%s222 + $0x68] sm:$0xf]
        %v253 = vld [vmem:[%s222 + $0x6c] sm:$0xf]
        %v254 = vld [vmem:[%s222 + $0x70] sm:$0xf]
        %v255 = vld [vmem:[%s222 + $0x74] sm:$0xf]
        %v256 = vld [vmem:[%s222 + $0x78] sm:$0xf]
        %v257 = vld [vmem:[%s222 + $0x7c] sm:$0xf]
        %v258 = vld [vmem:[%s1] sm:$0xf]
        %v259 = vld [vmem:[%s1 + $0x4] sm:$0xf]
        %v260 = vld [vmem:[%s1 + $0x8] sm:$0xf]
        %v261 = vld [vmem:[%s1 + $0xc] sm:$0xf]
        %v262 = vld [vmem:[%s1 + $0x10] sm:$0x3]
        %v263 = vld [vmem:[%s2] sm:$0x1]
        %v265 = vlaneseq
        %v266 = vshrl.u32 %v265, 7
        %v267 = vsub.s32 0, %v266
        %v268 = vrot.slane %v263, %v267
        %v302 = vunpack.c.l.b16 %v226
        %v303 = vunpack.c.l.b16 %v227
        %v304 = vunpack.c.l.b16 %v228
        %v305 = vunpack.c.l.b16 %v229
        %v306 = vunpack.c.l.b16 %v230
        %v307 = vunpack.c.l.b16 %v231
        %v308 = vunpack.c.l.b16 %v232
        %v309 = vunpack.c.l.b16 %v233
        %v310 = vunpack.c.l.b16 %v234
        %v311 = vunpack.c.l.b16 %v235
        %v312 = vunpack.c.l.b16 %v236
        %v313 = vunpack.c.l.b16 %v237
        %v314 = vunpack.c.l.b16 %v238
        %v315 = vunpack.c.l.b16 %v239
        %v316 = vunpack.c.l.b16 %v240
        %v317 = vunpack.c.l.b16 %v241
        %v318 = vunpack.c.l.b16 %v242
        %v319 = vunpack.c.l.b16 %v243
        %v320 = vunpack.c.l.b16 %v244
        %v321 = vunpack.c.l.b16 %v245
        %v322 = vunpack.c.l.b16 %v246
        %v323 = vunpack.c.l.b16 %v247
        %v324 = vunpack.c.l.b16 %v248
        %v325 = vunpack.c.l.b16 %v249
        %v326 = vunpack.c.l.b16 %v250
        %v327 = vunpack.c.l.b16 %v251
        %v328 = vunpack.c.l.b16 %v252
        %v329 = vunpack.c.l.b16 %v253
        %v330 = vunpack.c.l.b16 %v254
        %v331 = vunpack.c.l.b16 %v255
        %v332 = vunpack.c.l.b16 %v256
        %v333 = vunpack.c.l.b16 %v257
        %v334 = vpack.c.b16 %v303, %v302
        %v335 = vpack.c.b16 %v305, %v304
        %v336 = vpack.c.b16 %v307, %v306
        %v337 = vpack.c.b16 %v309, %v308
        %v338 = vpack.c.b16 %v311, %v310
        %v339 = vpack.c.b16 %v313, %v312
        %v340 = vpack.c.b16 %v315, %v314
        %v341 = vpack.c.b16 %v317, %v316
        %v342 = vpack.c.b16 %v319, %v318
        %v343 = vpack.c.b16 %v321, %v320
        %v344 = vpack.c.b16 %v323, %v322
        %v345 = vpack.c.b16 %v325, %v324
        %v346 = vpack.c.b16 %v327, %v326
        %v347 = vpack.c.b16 %v329, %v328
        %v348 = vpack.c.b16 %v331, %v330
        %v349 = vpack.c.b16 %v333, %v332
        %v355 = vunpack.c.l.b16 %v258
        %v356 = vunpack.c.l.b16 %v259
        %v357 = vunpack.c.l.b16 %v260
        %v358 = vunpack.c.l.b16 %v261
        %v359 = vunpack.c.l.b16 %v262
        %v360 = vpack.c.b16 %v356, %v355
        %v361 = vpack.c.b16 %v358, %v357
        %v362 = vpack.c.b16 %v359, %v359
        %vm365 = vcmask 293888
        %v367 = vsel %vm365, %v334, 0
        %v370 = vsel %vm365, %v335, 0
        %v373 = vsel %vm365, %v336, 0
        %v376 = vsel %vm365, %v337, 0
        %v379 = vsel %vm365, %v338, 0
        %v382 = vsel %vm365, %v339, 0
        %v385 = vsel %vm365, %v340, 0
        %v388 = vsel %vm365, %v341, 0
        %v391 = vsel %vm365, %v342, 0
        %v394 = vsel %vm365, %v343, 0
        %v397 = vsel %vm365, %v344, 0
        %v400 = vsel %vm365, %v345, 0
        %v403 = vsel %vm365, %v346, 0
        %v406 = vsel %vm365, %v347, 0
        %v409 = vsel %vm365, %v348, 0
        %v412 = vsel %vm365, %v349, 0
        %vm414 = vcmask 1041408
        %v416 = vsel %vm414, %v362, 0
        %418 = vmatprep.subr.bf16.mxu0 0
        %419 = vmatpush1.bf16.msra.mxu0 0
        %420 = vmatprep.subr.bf16.mxu0 0
        %421 = vmatpush1.bf16.msra.mxu0 0
        %422 = vmatprep.subr.bf16.mxu0 0
        %423 = vmatpush1.bf16.msra.mxu0 0
        %424 = vmatprep.subr.bf16.mxu0 0
        %425 = vmatpush1.bf16.msra.mxu0 0
        %426 = vmatprep.subr.bf16.mxu0 0
        %427 = vmatpush1.bf16.msra.mxu0 0
        %428 = vmatprep.subr.bf16.mxu0 0
        %429 = vmatpush1.bf16.msra.mxu0 %v416
        %430 = vmatprep.subr.bf16.mxu0 0
        %431 = vmatpush1.bf16.msra.mxu0 %v361
        %432 = vmatprep.subr.bf16.mxu0 0
        %433 = vmatpush1.bf16.msra.mxu0 %v360
        %434 = vmatprep.subr.bf16.mxu0 0
        %435 = vmatpush2.bf16.msra.mxu0 0
        %436 = vmatprep.subr.bf16.mxu0 0
        %437 = vmatpush2.bf16.msra.mxu0 0
        %438 = vmatprep.subr.bf16.mxu0 0
        %439 = vmatpush2.bf16.msra.mxu0 0
        %440 = vmatprep.subr.bf16.mxu0 0
        %441 = vmatpush2.bf16.msra.mxu0 0
        %442 = vmatprep.subr.bf16.mxu0 0
        %443 = vmatpush2.bf16.msra.mxu0 0
        %444 = vmatprep.subr.bf16.mxu0 0
        %445 = vmatpush2.bf16.msra.mxu0 0
        %446 = vmatprep.subr.bf16.mxu0 0
        %447 = vmatpush2.bf16.msra.mxu0 0
        %448 = vmatprep.subr.bf16.mxu0 0
        %449 = vmatpush2.bf16.msra.mxu0 0
        %450 = vmatprep.mubr.bf16.mxu0 0
        %451 = vmatmul.mubr.bf16.gmra.mxu0 %v367
        %v452 = vpop.f32.mrf.mxu0
        %v453 = vadd.f32 %v268, %v452
        %v454 = vpop.f32.mrf.mxu0
        %v455 = vpop.f32.mrf.mxu0
        %v456 = vadd.f32 %v268, %v455
        %v457 = vpop.f32.mrf.mxu0
        %458 = vmatprep.mubr.bf16.mxu0 0
        %459 = vmatmul.mubr.bf16.gmra.mxu0 %v370
        %v460 = vpop.f32.mrf.mxu0
        %v461 = vadd.f32 %v268, %v460
        %v462 = vpop.f32.mrf.mxu0
        %v463 = vpop.f32.mrf.mxu0
        %v464 = vadd.f32 %v268, %v463
        %v465 = vpop.f32.mrf.mxu0
        %466 = vmatprep.mubr.bf16.mxu0 0
        %467 = vmatmul.mubr.bf16.gmra.mxu0 %v373
        %v468 = vpop.f32.mrf.mxu0
        %v469 = vadd.f32 %v268, %v468
        %v470 = vpop.f32.mrf.mxu0
        %v471 = vpop.f32.mrf.mxu0
        %v472 = vadd.f32 %v268, %v471
        %v473 = vpop.f32.mrf.mxu0
        %474 = vmatprep.mubr.bf16.mxu0 0
        %475 = vmatmul.mubr.bf16.gmra.mxu0 %v376
        %v476 = vpop.f32.mrf.mxu0
        %v477 = vadd.f32 %v268, %v476
        %v478 = vpop.f32.mrf.mxu0
        %v479 = vpop.f32.mrf.mxu0
        %v480 = vadd.f32 %v268, %v479
        %v481 = vpop.f32.mrf.mxu0
        %482 = vmatprep.mubr.bf16.mxu0 0
        %483 = vmatmul.mubr.bf16.gmra.mxu0 %v379
        %v484 = vpop.f32.mrf.mxu0
        %v485 = vadd.f32 %v268, %v484
        %v486 = vpop.f32.mrf.mxu0
        %v487 = vpop.f32.mrf.mxu0
        %v488 = vadd.f32 %v268, %v487
        %v489 = vpop.f32.mrf.mxu0
        %490 = vmatprep.mubr.bf16.mxu0 0
        %491 = vmatmul.mubr.bf16.gmra.mxu0 %v382
        %v492 = vpop.f32.mrf.mxu0
        %v493 = vadd.f32 %v268, %v492
        %v494 = vpop.f32.mrf.mxu0
        %v495 = vpop.f32.mrf.mxu0
        %v496 = vadd.f32 %v268, %v495
        %v497 = vpop.f32.mrf.mxu0
        %498 = vmatprep.mubr.bf16.mxu0 0
        %499 = vmatmul.mubr.bf16.gmra.mxu0 %v385
        %v500 = vpop.f32.mrf.mxu0
        %v501 = vadd.f32 %v268, %v500
        %v502 = vpop.f32.mrf.mxu0
        %v503 = vpop.f32.mrf.mxu0
        %v504 = vadd.f32 %v268, %v503
        %v505 = vpop.f32.mrf.mxu0
        %506 = vmatprep.mubr.bf16.mxu0 0
        %507 = vmatmul.mubr.bf16.gmra.mxu0 %v388
        %v508 = vpop.f32.mrf.mxu0
        %v509 = vadd.f32 %v268, %v508
        %v510 = vpop.f32.mrf.mxu0
        %v511 = vpop.f32.mrf.mxu0
        %v512 = vadd.f32 %v268, %v511
        %v513 = vpop.f32.mrf.mxu0
        %514 = vmatprep.mubr.bf16.mxu0 0
        %515 = vmatmul.mubr.bf16.gmra.mxu0 %v391
        %v516 = vpop.f32.mrf.mxu0
        %v517 = vadd.f32 %v268, %v516
        %v518 = vpop.f32.mrf.mxu0
        %v519 = vpop.f32.mrf.mxu0
        %v520 = vadd.f32 %v268, %v519
        %v521 = vpop.f32.mrf.mxu0
        %522 = vmatprep.mubr.bf16.mxu0 0
        %523 = vmatmul.mubr.bf16.gmra.mxu0 %v394
        %v524 = vpop.f32.mrf.mxu0
        %v525 = vadd.f32 %v268, %v524
        %v526 = vpop.f32.mrf.mxu0
        %v527 = vpop.f32.mrf.mxu0
        %v528 = vadd.f32 %v268, %v527
        %v529 = vpop.f32.mrf.mxu0
        %530 = vmatprep.mubr.bf16.mxu0 0
        %531 = vmatmul.mubr.bf16.gmra.mxu0 %v397
        %v532 = vpop.f32.mrf.mxu0
        %v533 = vadd.f32 %v268, %v532
        %v534 = vpop.f32.mrf.mxu0
        %v535 = vpop.f32.mrf.mxu0
        %v536 = vadd.f32 %v268, %v535
        %v537 = vpop.f32.mrf.mxu0
        %538 = vmatprep.mubr.bf16.mxu0 0
        %539 = vmatmul.mubr.bf16.gmra.mxu0 %v400
        %v540 = vpop.f32.mrf.mxu0
        %v541 = vadd.f32 %v268, %v540
        %v542 = vpop.f32.mrf.mxu0
        %v543 = vpop.f32.mrf.mxu0
        %v544 = vadd.f32 %v268, %v543
        %v545 = vpop.f32.mrf.mxu0
        %546 = vmatprep.mubr.bf16.mxu0 0
        %547 = vmatmul.mubr.bf16.gmra.mxu0 %v403
        %v548 = vpop.f32.mrf.mxu0
        %v549 = vadd.f32 %v268, %v548
        %v550 = vpop.f32.mrf.mxu0
        %v551 = vpop.f32.mrf.mxu0
        %v552 = vadd.f32 %v268, %v551
        %v553 = vpop.f32.mrf.mxu0
        %554 = vmatprep.mubr.bf16.mxu0 0
        %555 = vmatmul.mubr.bf16.gmra.mxu0 %v406
        %v556 = vpop.f32.mrf.mxu0
        %v557 = vadd.f32 %v268, %v556
        %v558 = vpop.f32.mrf.mxu0
        %v559 = vpop.f32.mrf.mxu0
        %v560 = vadd.f32 %v268, %v559
        %v561 = vpop.f32.mrf.mxu0
        %562 = vmatprep.mubr.bf16.mxu0 0
        %563 = vmatmul.mubr.bf16.gmra.mxu0 %v409
        %v564 = vpop.f32.mrf.mxu0
        %v565 = vadd.f32 %v268, %v564
        %v566 = vpop.f32.mrf.mxu0
        %v567 = vpop.f32.mrf.mxu0
        %v568 = vadd.f32 %v268, %v567
        %v569 = vpop.f32.mrf.mxu0
        %570 = vmatprep.mubr.bf16.mxu0 0
        %571 = vmatmul.mubr.bf16.gmra.mxu0 %v412
        %v572 = vpop.f32.mrf.mxu0
        %v573 = vadd.f32 %v268, %v572
        %v574 = vpop.f32.mrf.mxu0
        %v575 = vpop.f32.mrf.mxu0
        %v576 = vadd.f32 %v268, %v575
        %v577 = vpop.f32.mrf.mxu0
        %578 = vdwg.mxu0
        %v579 = vmul.f32 %v453, 0.5
        %v580 = vmul.f32 %v456, 0.5
        %v581 = vmul.f32 %v461, 0.5
        %v582 = vmul.f32 %v464, 0.5
        %v583 = vmul.f32 %v469, 0.5
        %v584 = vmul.f32 %v472, 0.5
        %v585 = vmul.f32 %v477, 0.5
        %v586 = vmul.f32 %v480, 0.5
        %v587 = vmul.f32 %v485, 0.5
        %v588 = vmul.f32 %v488, 0.5
        %v589 = vmul.f32 %v493, 0.5
        %v590 = vmul.f32 %v496, 0.5
        %v591 = vmul.f32 %v501, 0.5
        %v592 = vmul.f32 %v504, 0.5
        %v593 = vmul.f32 %v509, 0.5
        %v594 = vmul.f32 %v512, 0.5
        %v595 = vmul.f32 %v517, 0.5
        %v596 = vmul.f32 %v520, 0.5
        %v597 = vmul.f32 %v525, 0.5
        %v598 = vmul.f32 %v528, 0.5
        %v599 = vmul.f32 %v533, 0.5
        %v600 = vmul.f32 %v536, 0.5
        %v601 = vmul.f32 %v541, 0.5
        %v602 = vmul.f32 %v544, 0.5
        %v603 = vmul.f32 %v549, 0.5
        %v604 = vmul.f32 %v552, 0.5
        %v605 = vmul.f32 %v557, 0.5
        %v606 = vmul.f32 %v560, 0.5
        %v607 = vmul.f32 %v565, 0.5
        %v608 = vmul.f32 %v568, 0.5
        %v609 = vmul.f32 %v573, 0.5
        %v610 = vmul.f32 %v576, 0.5
        %v611 = vmul.f32 %v453, 0.70710677
        %v612 = vmul.f32 %v456, 0.70710677
        %v613 = vmul.f32 %v461, 0.70710677
        %v614 = vmul.f32 %v464, 0.70710677
        %v615 = vmul.f32 %v469, 0.70710677
        %v616 = vmul.f32 %v472, 0.70710677
        %v617 = vmul.f32 %v477, 0.70710677
        %v618 = vmul.f32 %v480, 0.70710677
        %v619 = vmul.f32 %v485, 0.70710677
        %v620 = vmul.f32 %v488, 0.70710677
        %v621 = vmul.f32 %v493, 0.70710677
        %v622 = vmul.f32 %v496, 0.70710677
        %v623 = vmul.f32 %v501, 0.70710677
        %v624 = vmul.f32 %v504, 0.70710677
        %v625 = vmul.f32 %v509, 0.70710677
        %v626 = vmul.f32 %v512, 0.70710677
        %v627 = vmul.f32 %v517, 0.70710677
        %v628 = vmul.f32 %v520, 0.70710677
        %v629 = vmul.f32 %v525, 0.70710677
        %v630 = vmul.f32 %v528, 0.70710677
        %v631 = vmul.f32 %v533, 0.70710677
        %v632 = vmul.f32 %v536, 0.70710677
        %v633 = vmul.f32 %v541, 0.70710677
        %v634 = vmul.f32 %v544, 0.70710677
        %v635 = vmul.f32 %v549, 0.70710677
        %v636 = vmul.f32 %v552, 0.70710677
        %v637 = vmul.f32 %v557, 0.70710677
        %v638 = vmul.f32 %v560, 0.70710677
        %v639 = vmul.f32 %v565, 0.70710677
        %v640 = vmul.f32 %v568, 0.70710677
        %v641 = vmul.f32 %v573, 0.70710677
        %v642 = vmul.f32 %v576, 0.70710677
        %v643 = vand.u32 2147483647, %v611
        %v644 = vand.u32 2147483647, %v612
        %v645 = vand.u32 2147483647, %v613
        %v646 = vand.u32 2147483647, %v614
        %v647 = vand.u32 2147483647, %v615
        %v648 = vand.u32 2147483647, %v616
        %v649 = vand.u32 2147483647, %v617
        %v650 = vand.u32 2147483647, %v618
        %v651 = vand.u32 2147483647, %v619
        %v652 = vand.u32 2147483647, %v620
        %v653 = vand.u32 2147483647, %v621
        %v654 = vand.u32 2147483647, %v622
        %v655 = vand.u32 2147483647, %v623
        %v656 = vand.u32 2147483647, %v624
        %v657 = vand.u32 2147483647, %v625
        %v658 = vand.u32 2147483647, %v626
        %v659 = vand.u32 2147483647, %v627
        %v660 = vand.u32 2147483647, %v628
        %v661 = vand.u32 2147483647, %v629
        %v662 = vand.u32 2147483647, %v630
        %v663 = vand.u32 2147483647, %v631
        %v664 = vand.u32 2147483647, %v632
        %v665 = vand.u32 2147483647, %v633
        %v666 = vand.u32 2147483647, %v634
        %v667 = vand.u32 2147483647, %v635
        %v668 = vand.u32 2147483647, %v636
        %v669 = vand.u32 2147483647, %v637
        %v670 = vand.u32 2147483647, %v638
        %v671 = vand.u32 2147483647, %v639
        %v672 = vand.u32 2147483647, %v640
        %v673 = vand.u32 2147483647, %v641
        %v674 = vand.u32 2147483647, %v642
        %v675 = vmul.f32 %v643, 0.3275911
        %v676 = vmul.f32 %v644, 0.3275911
        %v677 = vmul.f32 %v645, 0.3275911
        %v678 = vmul.f32 %v646, 0.3275911
        %v679 = vmul.f32 %v647, 0.3275911
        %v680 = vmul.f32 %v648, 0.3275911
        %v681 = vmul.f32 %v649, 0.3275911
        %v682 = vmul.f32 %v650, 0.3275911
        %v683 = vmul.f32 %v651, 0.3275911
        %v684 = vmul.f32 %v652, 0.3275911
        %v685 = vmul.f32 %v653, 0.3275911
        %v686 = vmul.f32 %v654, 0.3275911
        %v687 = vmul.f32 %v655, 0.3275911
        %v688 = vmul.f32 %v656, 0.3275911
        %v689 = vmul.f32 %v657, 0.3275911
        %v690 = vmul.f32 %v658, 0.3275911
        %v691 = vmul.f32 %v659, 0.3275911
        %v692 = vmul.f32 %v660, 0.3275911
        %v693 = vmul.f32 %v661, 0.3275911
        %v694 = vmul.f32 %v662, 0.3275911
        %v695 = vmul.f32 %v663, 0.3275911
        %v696 = vmul.f32 %v664, 0.3275911
        %v697 = vmul.f32 %v665, 0.3275911
        %v698 = vmul.f32 %v666, 0.3275911
        %v699 = vmul.f32 %v667, 0.3275911
        %v700 = vmul.f32 %v668, 0.3275911
        %v701 = vmul.f32 %v669, 0.3275911
        %v702 = vmul.f32 %v670, 0.3275911
        %v703 = vmul.f32 %v671, 0.3275911
        %v704 = vmul.f32 %v672, 0.3275911
        %v705 = vmul.f32 %v673, 0.3275911
        %v706 = vmul.f32 %v674, 0.3275911
        %v707 = vadd.f32 %v675, 1.0
        %v708 = vadd.f32 %v676, 1.0
        %v709 = vadd.f32 %v677, 1.0
        %v710 = vadd.f32 %v678, 1.0
        %v711 = vadd.f32 %v679, 1.0
        %v712 = vadd.f32 %v680, 1.0
        %v713 = vadd.f32 %v681, 1.0
        %v714 = vadd.f32 %v682, 1.0
        %v715 = vadd.f32 %v683, 1.0
        %v716 = vadd.f32 %v684, 1.0
        %v717 = vadd.f32 %v685, 1.0
        %v718 = vadd.f32 %v686, 1.0
        %v719 = vadd.f32 %v687, 1.0
        %v720 = vadd.f32 %v688, 1.0
        %v721 = vadd.f32 %v689, 1.0
        %v722 = vadd.f32 %v690, 1.0
        %v723 = vadd.f32 %v691, 1.0
        %v724 = vadd.f32 %v692, 1.0
        %v725 = vadd.f32 %v693, 1.0
        %v726 = vadd.f32 %v694, 1.0
        %v727 = vadd.f32 %v695, 1.0
        %v728 = vadd.f32 %v696, 1.0
        %v729 = vadd.f32 %v697, 1.0
        %v730 = vadd.f32 %v698, 1.0
        %v731 = vadd.f32 %v699, 1.0
        %v732 = vadd.f32 %v700, 1.0
        %v733 = vadd.f32 %v701, 1.0
        %v734 = vadd.f32 %v702, 1.0
        %v735 = vadd.f32 %v703, 1.0
        %v736 = vadd.f32 %v704, 1.0
        %v737 = vadd.f32 %v705, 1.0
        %v738 = vadd.f32 %v706, 1.0
        %v739 = vrcp.pop %v707
        %v740 = vmul.f32 1.0, %v739
        %v741 = vrcp.pop %v708
        %v742 = vmul.f32 1.0, %v741
        %v743 = vrcp.pop %v709
        %v744 = vmul.f32 1.0, %v743
        %v745 = vrcp.pop %v710
        %v746 = vmul.f32 1.0, %v745
        %v747 = vrcp.pop %v711
        %v748 = vmul.f32 1.0, %v747
        %v749 = vrcp.pop %v712
        %v750 = vmul.f32 1.0, %v749
        %v751 = vrcp.pop %v713
        %v752 = vmul.f32 1.0, %v751
        %v753 = vrcp.pop %v714
        %v754 = vmul.f32 1.0, %v753
        %v755 = vrcp.pop %v715
        %v756 = vmul.f32 1.0, %v755
        %v757 = vrcp.pop %v716
        %v758 = vmul.f32 1.0, %v757
        %v759 = vrcp.pop %v717
        %v760 = vmul.f32 1.0, %v759
        %v761 = vrcp.pop %v718
        %v762 = vmul.f32 1.0, %v761
        %v763 = vrcp.pop %v719
        %v764 = vmul.f32 1.0, %v763
        %v765 = vrcp.pop %v720
        %v766 = vmul.f32 1.0, %v765
        %v767 = vrcp.pop %v721
        %v768 = vmul.f32 1.0, %v767
        %v769 = vrcp.pop %v722
        %v770 = vmul.f32 1.0, %v769
        %v771 = vrcp.pop %v723
        %v772 = vmul.f32 1.0, %v771
        %v773 = vrcp.pop %v724
        %v774 = vmul.f32 1.0, %v773
        %v775 = vrcp.pop %v725
        %v776 = vmul.f32 1.0, %v775
        %v777 = vrcp.pop %v726
        %v778 = vmul.f32 1.0, %v777
        %v779 = vrcp.pop %v727
        %v780 = vmul.f32 1.0, %v779
        %v781 = vrcp.pop %v728
        %v782 = vmul.f32 1.0, %v781
        %v783 = vrcp.pop %v729
        %v784 = vmul.f32 1.0, %v783
        %v785 = vrcp.pop %v730
        %v786 = vmul.f32 1.0, %v785
        %v787 = vrcp.pop %v731
        %v788 = vmul.f32 1.0, %v787
        %v789 = vrcp.pop %v732
        %v790 = vmul.f32 1.0, %v789
        %v791 = vrcp.pop %v733
        %v792 = vmul.f32 1.0, %v791
        %v793 = vrcp.pop %v734
        %v794 = vmul.f32 1.0, %v793
        %v795 = vrcp.pop %v735
        %v796 = vmul.f32 1.0, %v795
        %v797 = vrcp.pop %v736
        %v798 = vmul.f32 1.0, %v797
        %v799 = vrcp.pop %v737
        %v800 = vmul.f32 1.0, %v799
        %v801 = vrcp.pop %v738
        %v802 = vmul.f32 1.0, %v801
        %v803 = vmul.f32 %v740, 1.0614054
        %v804 = vmul.f32 %v742, 1.0614054
        %v805 = vmul.f32 %v744, 1.0614054
        %v806 = vmul.f32 %v746, 1.0614054
        %v807 = vmul.f32 %v748, 1.0614054
        %v808 = vmul.f32 %v750, 1.0614054
        %v809 = vmul.f32 %v752, 1.0614054
        %v810 = vmul.f32 %v754, 1.0614054
        %v811 = vmul.f32 %v756, 1.0614054
        %v812 = vmul.f32 %v758, 1.0614054
        %v813 = vmul.f32 %v760, 1.0614054
        %v814 = vmul.f32 %v762, 1.0614054
        %v815 = vmul.f32 %v764, 1.0614054
        %v816 = vmul.f32 %v766, 1.0614054
        %v817 = vmul.f32 %v768, 1.0614054
        %v818 = vmul.f32 %v770, 1.0614054
        %v819 = vmul.f32 %v772, 1.0614054
        %v820 = vmul.f32 %v774, 1.0614054
        %v821 = vmul.f32 %v776, 1.0614054
        %v822 = vmul.f32 %v778, 1.0614054
        %v823 = vmul.f32 %v780, 1.0614054
        %v824 = vmul.f32 %v782, 1.0614054
        %v825 = vmul.f32 %v784, 1.0614054
        %v826 = vmul.f32 %v786, 1.0614054
        %v827 = vmul.f32 %v788, 1.0614054
        %v828 = vmul.f32 %v790, 1.0614054
        %v829 = vmul.f32 %v792, 1.0614054
        %v830 = vmul.f32 %v794, 1.0614054
        %v831 = vmul.f32 %v796, 1.0614054
        %v832 = vmul.f32 %v798, 1.0614054
        %v833 = vmul.f32 %v800, 1.0614054
        %v834 = vmul.f32 %v802, 1.0614054
        %v835 = vadd.f32 %v803, -1.4531521
        %v836 = vadd.f32 %v804, -1.4531521
        %v837 = vadd.f32 %v805, -1.4531521
        %v838 = vadd.f32 %v806, -1.4531521
        %v839 = vadd.f32 %v807, -1.4531521
        %v840 = vadd.f32 %v808, -1.4531521
        %v841 = vadd.f32 %v809, -1.4531521
        %v842 = vadd.f32 %v810, -1.4531521
        %v843 = vadd.f32 %v811, -1.4531521
        %v844 = vadd.f32 %v812, -1.4531521
        %v845 = vadd.f32 %v813, -1.4531521
        %v846 = vadd.f32 %v814, -1.4531521
        %v847 = vadd.f32 %v815, -1.4531521
        %v848 = vadd.f32 %v816, -1.4531521
        %v849 = vadd.f32 %v817, -1.4531521
        %v850 = vadd.f32 %v818, -1.4531521
        %v851 = vadd.f32 %v819, -1.4531521
        %v852 = vadd.f32 %v820, -1.4531521
        %v853 = vadd.f32 %v821, -1.4531521
        %v854 = vadd.f32 %v822, -1.4531521
        %v855 = vadd.f32 %v823, -1.4531521
        %v856 = vadd.f32 %v824, -1.4531521
        %v857 = vadd.f32 %v825, -1.4531521
        %v858 = vadd.f32 %v826, -1.4531521
        %v859 = vadd.f32 %v827, -1.4531521
        %v860 = vadd.f32 %v828, -1.4531521
        %v861 = vadd.f32 %v829, -1.4531521
        %v862 = vadd.f32 %v830, -1.4531521
        %v863 = vadd.f32 %v831, -1.4531521
        %v864 = vadd.f32 %v832, -1.4531521
        %v865 = vadd.f32 %v833, -1.4531521
        %v866 = vadd.f32 %v834, -1.4531521
        %v867 = vmul.f32 %v835, %v740
        %v868 = vmul.f32 %v836, %v742
        %v869 = vmul.f32 %v837, %v744
        %v870 = vmul.f32 %v838, %v746
        %v871 = vmul.f32 %v839, %v748
        %v872 = vmul.f32 %v840, %v750
        %v873 = vmul.f32 %v841, %v752
        %v874 = vmul.f32 %v842, %v754
        %v875 = vmul.f32 %v843, %v756
        %v876 = vmul.f32 %v844, %v758
        %v877 = vmul.f32 %v845, %v760
        %v878 = vmul.f32 %v846, %v762
        %v879 = vmul.f32 %v847, %v764
        %v880 = vmul.f32 %v848, %v766
        %v881 = vmul.f32 %v849, %v768
        %v882 = vmul.f32 %v850, %v770
        %v883 = vmul.f32 %v851, %v772
        %v884 = vmul.f32 %v852, %v774
        %v885 = vmul.f32 %v853, %v776
        %v886 = vmul.f32 %v854, %v778
        %v887 = vmul.f32 %v855, %v780
        %v888 = vmul.f32 %v856, %v782
        %v889 = vmul.f32 %v857, %v784
        %v890 = vmul.f32 %v858, %v786
        %v891 = vmul.f32 %v859, %v788
        %v892 = vmul.f32 %v860, %v790
        %v893 = vmul.f32 %v861, %v792
        %v894 = vmul.f32 %v862, %v794
        %v895 = vmul.f32 %v863, %v796
        %v896 = vmul.f32 %v864, %v798
        %v897 = vmul.f32 %v865, %v800
        %v898 = vmul.f32 %v866, %v802
        %v899 = vadd.f32 %v867, 1.4214138
        %v900 = vadd.f32 %v868, 1.4214138
        %v901 = vadd.f32 %v869, 1.4214138
        %v902 = vadd.f32 %v870, 1.4214138
        %v903 = vadd.f32 %v871, 1.4214138
        %v904 = vadd.f32 %v872, 1.4214138
        %v905 = vadd.f32 %v873, 1.4214138
        %v906 = vadd.f32 %v874, 1.4214138
        %v907 = vadd.f32 %v875, 1.4214138
        %v908 = vadd.f32 %v876, 1.4214138
        %v909 = vadd.f32 %v877, 1.4214138
        %v910 = vadd.f32 %v878, 1.4214138
        %v911 = vadd.f32 %v879, 1.4214138
        %v912 = vadd.f32 %v880, 1.4214138
        %v913 = vadd.f32 %v881, 1.4214138
        %v914 = vadd.f32 %v882, 1.4214138
        %v915 = vadd.f32 %v883, 1.4214138
        %v916 = vadd.f32 %v884, 1.4214138
        %v917 = vadd.f32 %v885, 1.4214138
        %v918 = vadd.f32 %v886, 1.4214138
        %v919 = vadd.f32 %v887, 1.4214138
        %v920 = vadd.f32 %v888, 1.4214138
        %v921 = vadd.f32 %v889, 1.4214138
        %v922 = vadd.f32 %v890, 1.4214138
        %v923 = vadd.f32 %v891, 1.4214138
        %v924 = vadd.f32 %v892, 1.4214138
        %v925 = vadd.f32 %v893, 1.4214138
        %v926 = vadd.f32 %v894, 1.4214138
        %v927 = vadd.f32 %v895, 1.4214138
        %v928 = vadd.f32 %v896, 1.4214138
        %v929 = vadd.f32 %v897, 1.4214138
        %v930 = vadd.f32 %v898, 1.4214138
        %v931 = vmul.f32 %v899, %v740
        %v932 = vmul.f32 %v900, %v742
        %v933 = vmul.f32 %v901, %v744
        %v934 = vmul.f32 %v902, %v746
        %v935 = vmul.f32 %v903, %v748
        %v936 = vmul.f32 %v904, %v750
        %v937 = vmul.f32 %v905, %v752
        %v938 = vmul.f32 %v906, %v754
        %v939 = vmul.f32 %v907, %v756
        %v940 = vmul.f32 %v908, %v758
        %v941 = vmul.f32 %v909, %v760
        %v942 = vmul.f32 %v910, %v762
        %v943 = vmul.f32 %v911, %v764
        %v944 = vmul.f32 %v912, %v766
        %v945 = vmul.f32 %v913, %v768
        %v946 = vmul.f32 %v914, %v770
        %v947 = vmul.f32 %v915, %v772
        %v948 = vmul.f32 %v916, %v774
        %v949 = vmul.f32 %v917, %v776
        %v950 = vmul.f32 %v918, %v778
        %v951 = vmul.f32 %v919, %v780
        %v952 = vmul.f32 %v920, %v782
        %v953 = vmul.f32 %v921, %v784
        %v954 = vmul.f32 %v922, %v786
        %v955 = vmul.f32 %v923, %v788
        %v956 = vmul.f32 %v924, %v790
        %v957 = vmul.f32 %v925, %v792
        %v958 = vmul.f32 %v926, %v794
        %v959 = vmul.f32 %v927, %v796
        %v960 = vmul.f32 %v928, %v798
        %v961 = vmul.f32 %v929, %v800
        %v962 = vmul.f32 %v930, %v802
        %v963 = vadd.f32 %v931, -0.28449672
        %v964 = vadd.f32 %v932, -0.28449672
        %v965 = vadd.f32 %v933, -0.28449672
        %v966 = vadd.f32 %v934, -0.28449672
        %v967 = vadd.f32 %v935, -0.28449672
        %v968 = vadd.f32 %v936, -0.28449672
        %v969 = vadd.f32 %v937, -0.28449672
        %v970 = vadd.f32 %v938, -0.28449672
        %v971 = vadd.f32 %v939, -0.28449672
        %v972 = vadd.f32 %v940, -0.28449672
        %v973 = vadd.f32 %v941, -0.28449672
        %v974 = vadd.f32 %v942, -0.28449672
        %v975 = vadd.f32 %v943, -0.28449672
        %v976 = vadd.f32 %v944, -0.28449672
        %v977 = vadd.f32 %v945, -0.28449672
        %v978 = vadd.f32 %v946, -0.28449672
        %v979 = vadd.f32 %v947, -0.28449672
        %v980 = vadd.f32 %v948, -0.28449672
        %v981 = vadd.f32 %v949, -0.28449672
        %v982 = vadd.f32 %v950, -0.28449672
        %v983 = vadd.f32 %v951, -0.28449672
        %v984 = vadd.f32 %v952, -0.28449672
        %v985 = vadd.f32 %v953, -0.28449672
        %v986 = vadd.f32 %v954, -0.28449672
        %v987 = vadd.f32 %v955, -0.28449672
        %v988 = vadd.f32 %v956, -0.28449672
        %v989 = vadd.f32 %v957, -0.28449672
        %v990 = vadd.f32 %v958, -0.28449672
        %v991 = vadd.f32 %v959, -0.28449672
        %v992 = vadd.f32 %v960, -0.28449672
        %v993 = vadd.f32 %v961, -0.28449672
        %v994 = vadd.f32 %v962, -0.28449672
        %v995 = vmul.f32 %v963, %v740
        %v996 = vmul.f32 %v964, %v742
        %v997 = vmul.f32 %v965, %v744
        %v998 = vmul.f32 %v966, %v746
        %v999 = vmul.f32 %v967, %v748
        %v1000 = vmul.f32 %v968, %v750
        %v1001 = vmul.f32 %v969, %v752
        %v1002 = vmul.f32 %v970, %v754
        %v1003 = vmul.f32 %v971, %v756
        %v1004 = vmul.f32 %v972, %v758
        %v1005 = vmul.f32 %v973, %v760
        %v1006 = vmul.f32 %v974, %v762
        %v1007 = vmul.f32 %v975, %v764
        %v1008 = vmul.f32 %v976, %v766
        %v1009 = vmul.f32 %v977, %v768
        %v1010 = vmul.f32 %v978, %v770
        %v1011 = vmul.f32 %v979, %v772
        %v1012 = vmul.f32 %v980, %v774
        %v1013 = vmul.f32 %v981, %v776
        %v1014 = vmul.f32 %v982, %v778
        %v1015 = vmul.f32 %v983, %v780
        %v1016 = vmul.f32 %v984, %v782
        %v1017 = vmul.f32 %v985, %v784
        %v1018 = vmul.f32 %v986, %v786
        %v1019 = vmul.f32 %v987, %v788
        %v1020 = vmul.f32 %v988, %v790
        %v1021 = vmul.f32 %v989, %v792
        %v1022 = vmul.f32 %v990, %v794
        %v1023 = vmul.f32 %v991, %v796
        %v1024 = vmul.f32 %v992, %v798
        %v1025 = vmul.f32 %v993, %v800
        %v1026 = vmul.f32 %v994, %v802
        %v1027 = vadd.f32 %v995, 0.2548296
        %v1028 = vadd.f32 %v996, 0.2548296
        %v1029 = vadd.f32 %v997, 0.2548296
        %v1030 = vadd.f32 %v998, 0.2548296
        %v1031 = vadd.f32 %v999, 0.2548296
        %v1032 = vadd.f32 %v1000, 0.2548296
        %v1033 = vadd.f32 %v1001, 0.2548296
        %v1034 = vadd.f32 %v1002, 0.2548296
        %v1035 = vadd.f32 %v1003, 0.2548296
        %v1036 = vadd.f32 %v1004, 0.2548296
        %v1037 = vadd.f32 %v1005, 0.2548296
        %v1038 = vadd.f32 %v1006, 0.2548296
        %v1039 = vadd.f32 %v1007, 0.2548296
        %v1040 = vadd.f32 %v1008, 0.2548296
        %v1041 = vadd.f32 %v1009, 0.2548296
        %v1042 = vadd.f32 %v1010, 0.2548296
        %v1043 = vadd.f32 %v1011, 0.2548296
        %v1044 = vadd.f32 %v1012, 0.2548296
        %v1045 = vadd.f32 %v1013, 0.2548296
        %v1046 = vadd.f32 %v1014, 0.2548296
        %v1047 = vadd.f32 %v1015, 0.2548296
        %v1048 = vadd.f32 %v1016, 0.2548296
        %v1049 = vadd.f32 %v1017, 0.2548296
        %v1050 = vadd.f32 %v1018, 0.2548296
        %v1051 = vadd.f32 %v1019, 0.2548296
        %v1052 = vadd.f32 %v1020, 0.2548296
        %v1053 = vadd.f32 %v1021, 0.2548296
        %v1054 = vadd.f32 %v1022, 0.2548296
        %v1055 = vadd.f32 %v1023, 0.2548296
        %v1056 = vadd.f32 %v1024, 0.2548296
        %v1057 = vadd.f32 %v1025, 0.2548296
        %v1058 = vadd.f32 %v1026, 0.2548296
        %v1059 = vmul.f32 %v1027, %v740
        %v1060 = vmul.f32 %v1028, %v742
        %v1061 = vmul.f32 %v1029, %v744
        %v1062 = vmul.f32 %v1030, %v746
        %v1063 = vmul.f32 %v1031, %v748
        %v1064 = vmul.f32 %v1032, %v750
        %v1065 = vmul.f32 %v1033, %v752
        %v1066 = vmul.f32 %v1034, %v754
        %v1067 = vmul.f32 %v1035, %v756
        %v1068 = vmul.f32 %v1036, %v758
        %v1069 = vmul.f32 %v1037, %v760
        %v1070 = vmul.f32 %v1038, %v762
        %v1071 = vmul.f32 %v1039, %v764
        %v1072 = vmul.f32 %v1040, %v766
        %v1073 = vmul.f32 %v1041, %v768
        %v1074 = vmul.f32 %v1042, %v770
        %v1075 = vmul.f32 %v1043, %v772
        %v1076 = vmul.f32 %v1044, %v774
        %v1077 = vmul.f32 %v1045, %v776
        %v1078 = vmul.f32 %v1046, %v778
        %v1079 = vmul.f32 %v1047, %v780
        %v1080 = vmul.f32 %v1048, %v782
        %v1081 = vmul.f32 %v1049, %v784
        %v1082 = vmul.f32 %v1050, %v786
        %v1083 = vmul.f32 %v1051, %v788
        %v1084 = vmul.f32 %v1052, %v790
        %v1085 = vmul.f32 %v1053, %v792
        %v1086 = vmul.f32 %v1054, %v794
        %v1087 = vmul.f32 %v1055, %v796
        %v1088 = vmul.f32 %v1056, %v798
        %v1089 = vmul.f32 %v1057, %v800
        %v1090 = vmul.f32 %v1058, %v802
        %v1091 = vsub.f32 0.0, %v643
        %v1092 = vsub.f32 0.0, %v644
        %v1093 = vsub.f32 0.0, %v645
        %v1094 = vsub.f32 0.0, %v646
        %v1095 = vsub.f32 0.0, %v647
        %v1096 = vsub.f32 0.0, %v648
        %v1097 = vsub.f32 0.0, %v649
        %v1098 = vsub.f32 0.0, %v650
        %v1099 = vsub.f32 0.0, %v651
        %v1100 = vsub.f32 0.0, %v652
        %v1101 = vsub.f32 0.0, %v653
        %v1102 = vsub.f32 0.0, %v654
        %v1103 = vsub.f32 0.0, %v655
        %v1104 = vsub.f32 0.0, %v656
        %v1105 = vsub.f32 0.0, %v657
        %v1106 = vsub.f32 0.0, %v658
        %v1107 = vsub.f32 0.0, %v659
        %v1108 = vsub.f32 0.0, %v660
        %v1109 = vsub.f32 0.0, %v661
        %v1110 = vsub.f32 0.0, %v662
        %v1111 = vsub.f32 0.0, %v663
        %v1112 = vsub.f32 0.0, %v664
        %v1113 = vsub.f32 0.0, %v665
        %v1114 = vsub.f32 0.0, %v666
        %v1115 = vsub.f32 0.0, %v667
        %v1116 = vsub.f32 0.0, %v668
        %v1117 = vsub.f32 0.0, %v669
        %v1118 = vsub.f32 0.0, %v670
        %v1119 = vsub.f32 0.0, %v671
        %v1120 = vsub.f32 0.0, %v672
        %v1121 = vsub.f32 0.0, %v673
        %v1122 = vsub.f32 0.0, %v674
        %v1123 = vmul.f32 %v1091, %v643
        %v1124 = vmul.f32 %v1092, %v644
        %v1125 = vmul.f32 %v1093, %v645
        %v1126 = vmul.f32 %v1094, %v646
        %v1127 = vmul.f32 %v1095, %v647
        %v1128 = vmul.f32 %v1096, %v648
        %v1129 = vmul.f32 %v1097, %v649
        %v1130 = vmul.f32 %v1098, %v650
        %v1131 = vmul.f32 %v1099, %v651
        %v1132 = vmul.f32 %v1100, %v652
        %v1133 = vmul.f32 %v1101, %v653
        %v1134 = vmul.f32 %v1102, %v654
        %v1135 = vmul.f32 %v1103, %v655
        %v1136 = vmul.f32 %v1104, %v656
        %v1137 = vmul.f32 %v1105, %v657
        %v1138 = vmul.f32 %v1106, %v658
        %v1139 = vmul.f32 %v1107, %v659
        %v1140 = vmul.f32 %v1108, %v660
        %v1141 = vmul.f32 %v1109, %v661
        %v1142 = vmul.f32 %v1110, %v662
        %v1143 = vmul.f32 %v1111, %v663
        %v1144 = vmul.f32 %v1112, %v664
        %v1145 = vmul.f32 %v1113, %v665
        %v1146 = vmul.f32 %v1114, %v666
        %v1147 = vmul.f32 %v1115, %v667
        %v1148 = vmul.f32 %v1116, %v668
        %v1149 = vmul.f32 %v1117, %v669
        %v1150 = vmul.f32 %v1118, %v670
        %v1151 = vmul.f32 %v1119, %v671
        %v1152 = vmul.f32 %v1120, %v672
        %v1153 = vmul.f32 %v1121, %v673
        %v1154 = vmul.f32 %v1122, %v674
        %v1155 = vmul.f32 %v1123, 1.442695
        %v1156 = vpow.pop %v1155
        %v1157 = vmul.f32 %v1124, 1.442695
        %v1158 = vpow.pop %v1157
        %v1159 = vmul.f32 %v1125, 1.442695
        %v1160 = vpow.pop %v1159
        %v1161 = vmul.f32 %v1126, 1.442695
        %v1162 = vpow.pop %v1161
        %v1163 = vmul.f32 %v1127, 1.442695
        %v1164 = vpow.pop %v1163
        %v1165 = vmul.f32 %v1128, 1.442695
        %v1166 = vpow.pop %v1165
        %v1167 = vmul.f32 %v1129, 1.442695
        %v1168 = vpow.pop %v1167
        %v1169 = vmul.f32 %v1130, 1.442695
        %v1170 = vpow.pop %v1169
        %v1171 = vmul.f32 %v1131, 1.442695
        %v1172 = vpow.pop %v1171
        %v1173 = vmul.f32 %v1132, 1.442695
        %v1174 = vpow.pop %v1173
        %v1175 = vmul.f32 %v1133, 1.442695
        %v1176 = vpow.pop %v1175
        %v1177 = vmul.f32 %v1134, 1.442695
        %v1178 = vpow.pop %v1177
        %v1179 = vmul.f32 %v1135, 1.442695
        %v1180 = vpow.pop %v1179
        %v1181 = vmul.f32 %v1136, 1.442695
        %v1182 = vpow.pop %v1181
        %v1183 = vmul.f32 %v1137, 1.442695
        %v1184 = vpow.pop %v1183
        %v1185 = vmul.f32 %v1138, 1.442695
        %v1186 = vpow.pop %v1185
        %v1187 = vmul.f32 %v1139, 1.442695
        %v1188 = vpow.pop %v1187
        %v1189 = vmul.f32 %v1140, 1.442695
        %v1190 = vpow.pop %v1189
        %v1191 = vmul.f32 %v1141, 1.442695
        %v1192 = vpow.pop %v1191
        %v1193 = vmul.f32 %v1142, 1.442695
        %v1194 = vpow.pop %v1193
        %v1195 = vmul.f32 %v1143, 1.442695
        %v1196 = vpow.pop %v1195
        %v1197 = vmul.f32 %v1144, 1.442695
        %v1198 = vpow.pop %v1197
        %v1199 = vmul.f32 %v1145, 1.442695
        %v1200 = vpow.pop %v1199
        %v1201 = vmul.f32 %v1146, 1.442695
        %v1202 = vpow.pop %v1201
        %v1203 = vmul.f32 %v1147, 1.442695
        %v1204 = vpow.pop %v1203
        %v1205 = vmul.f32 %v1148, 1.442695
        %v1206 = vpow.pop %v1205
        %v1207 = vmul.f32 %v1149, 1.442695
        %v1208 = vpow.pop %v1207
        %v1209 = vmul.f32 %v1150, 1.442695
        %v1210 = vpow.pop %v1209
        %v1211 = vmul.f32 %v1151, 1.442695
        %v1212 = vpow.pop %v1211
        %v1213 = vmul.f32 %v1152, 1.442695
        %v1214 = vpow.pop %v1213
        %v1215 = vmul.f32 %v1153, 1.442695
        %v1216 = vpow.pop %v1215
        %v1217 = vmul.f32 %v1154, 1.442695
        %v1218 = vpow.pop %v1217
        %v1219 = vmul.f32 %v1059, %v1156
        %v1220 = vmul.f32 %v1060, %v1158
        %v1221 = vmul.f32 %v1061, %v1160
        %v1222 = vmul.f32 %v1062, %v1162
        %v1223 = vmul.f32 %v1063, %v1164
        %v1224 = vmul.f32 %v1064, %v1166
        %v1225 = vmul.f32 %v1065, %v1168
        %v1226 = vmul.f32 %v1066, %v1170
        %v1227 = vmul.f32 %v1067, %v1172
        %v1228 = vmul.f32 %v1068, %v1174
        %v1229 = vmul.f32 %v1069, %v1176
        %v1230 = vmul.f32 %v1070, %v1178
        %v1231 = vmul.f32 %v1071, %v1180
        %v1232 = vmul.f32 %v1072, %v1182
        %v1233 = vmul.f32 %v1073, %v1184
        %v1234 = vmul.f32 %v1074, %v1186
        %v1235 = vmul.f32 %v1075, %v1188
        %v1236 = vmul.f32 %v1076, %v1190
        %v1237 = vmul.f32 %v1077, %v1192
        %v1238 = vmul.f32 %v1078, %v1194
        %v1239 = vmul.f32 %v1079, %v1196
        %v1240 = vmul.f32 %v1080, %v1198
        %v1241 = vmul.f32 %v1081, %v1200
        %v1242 = vmul.f32 %v1082, %v1202
        %v1243 = vmul.f32 %v1083, %v1204
        %v1244 = vmul.f32 %v1084, %v1206
        %v1245 = vmul.f32 %v1085, %v1208
        %v1246 = vmul.f32 %v1086, %v1210
        %v1247 = vmul.f32 %v1087, %v1212
        %v1248 = vmul.f32 %v1088, %v1214
        %v1249 = vmul.f32 %v1089, %v1216
        %v1250 = vmul.f32 %v1090, %v1218
        %v1251 = vsub.f32 1.0, %v1219
        %v1252 = vsub.f32 1.0, %v1220
        %v1253 = vsub.f32 1.0, %v1221
        %v1254 = vsub.f32 1.0, %v1222
        %v1255 = vsub.f32 1.0, %v1223
        %v1256 = vsub.f32 1.0, %v1224
        %v1257 = vsub.f32 1.0, %v1225
        %v1258 = vsub.f32 1.0, %v1226
        %v1259 = vsub.f32 1.0, %v1227
        %v1260 = vsub.f32 1.0, %v1228
        %v1261 = vsub.f32 1.0, %v1229
        %v1262 = vsub.f32 1.0, %v1230
        %v1263 = vsub.f32 1.0, %v1231
        %v1264 = vsub.f32 1.0, %v1232
        %v1265 = vsub.f32 1.0, %v1233
        %v1266 = vsub.f32 1.0, %v1234
        %v1267 = vsub.f32 1.0, %v1235
        %v1268 = vsub.f32 1.0, %v1236
        %v1269 = vsub.f32 1.0, %v1237
        %v1270 = vsub.f32 1.0, %v1238
        %v1271 = vsub.f32 1.0, %v1239
        %v1272 = vsub.f32 1.0, %v1240
        %v1273 = vsub.f32 1.0, %v1241
        %v1274 = vsub.f32 1.0, %v1242
        %v1275 = vsub.f32 1.0, %v1243
        %v1276 = vsub.f32 1.0, %v1244
        %v1277 = vsub.f32 1.0, %v1245
        %v1278 = vsub.f32 1.0, %v1246
        %v1279 = vsub.f32 1.0, %v1247
        %v1280 = vsub.f32 1.0, %v1248
        %v1281 = vsub.f32 1.0, %v1249
        %v1282 = vsub.f32 1.0, %v1250
        %vm1283 = vcmp.lt.f32.partialorder %v611, 0.0
        %vm1284 = vcmp.lt.f32.partialorder %v612, 0.0
        %vm1285 = vcmp.lt.f32.partialorder %v613, 0.0
        %vm1286 = vcmp.lt.f32.partialorder %v614, 0.0
        %vm1287 = vcmp.lt.f32.partialorder %v615, 0.0
        %vm1288 = vcmp.lt.f32.partialorder %v616, 0.0
        %vm1289 = vcmp.lt.f32.partialorder %v617, 0.0
        %vm1290 = vcmp.lt.f32.partialorder %v618, 0.0
        %vm1291 = vcmp.lt.f32.partialorder %v619, 0.0
        %vm1292 = vcmp.lt.f32.partialorder %v620, 0.0
        %vm1293 = vcmp.lt.f32.partialorder %v621, 0.0
        %vm1294 = vcmp.lt.f32.partialorder %v622, 0.0
        %vm1295 = vcmp.lt.f32.partialorder %v623, 0.0
        %vm1296 = vcmp.lt.f32.partialorder %v624, 0.0
        %vm1297 = vcmp.lt.f32.partialorder %v625, 0.0
        %vm1298 = vcmp.lt.f32.partialorder %v626, 0.0
        %vm1299 = vcmp.lt.f32.partialorder %v627, 0.0
        %vm1300 = vcmp.lt.f32.partialorder %v628, 0.0
        %vm1301 = vcmp.lt.f32.partialorder %v629, 0.0
        %vm1302 = vcmp.lt.f32.partialorder %v630, 0.0
        %vm1303 = vcmp.lt.f32.partialorder %v631, 0.0
        %vm1304 = vcmp.lt.f32.partialorder %v632, 0.0
        %vm1305 = vcmp.lt.f32.partialorder %v633, 0.0
        %vm1306 = vcmp.lt.f32.partialorder %v634, 0.0
        %vm1307 = vcmp.lt.f32.partialorder %v635, 0.0
        %vm1308 = vcmp.lt.f32.partialorder %v636, 0.0
        %vm1309 = vcmp.lt.f32.partialorder %v637, 0.0
        %vm1310 = vcmp.lt.f32.partialorder %v638, 0.0
        %vm1311 = vcmp.lt.f32.partialorder %v639, 0.0
        %vm1312 = vcmp.lt.f32.partialorder %v640, 0.0
        %vm1313 = vcmp.lt.f32.partialorder %v641, 0.0
        %vm1314 = vcmp.lt.f32.partialorder %v642, 0.0
        %v1315 = vsub.f32 0.0, %v1251
        %v1316 = vsub.f32 0.0, %v1252
        %v1317 = vsub.f32 0.0, %v1253
        %v1318 = vsub.f32 0.0, %v1254
        %v1319 = vsub.f32 0.0, %v1255
        %v1320 = vsub.f32 0.0, %v1256
        %v1321 = vsub.f32 0.0, %v1257
        %v1322 = vsub.f32 0.0, %v1258
        %v1323 = vsub.f32 0.0, %v1259
        %v1324 = vsub.f32 0.0, %v1260
        %v1325 = vsub.f32 0.0, %v1261
        %v1326 = vsub.f32 0.0, %v1262
        %v1327 = vsub.f32 0.0, %v1263
        %v1328 = vsub.f32 0.0, %v1264
        %v1329 = vsub.f32 0.0, %v1265
        %v1330 = vsub.f32 0.0, %v1266
        %v1331 = vsub.f32 0.0, %v1267
        %v1332 = vsub.f32 0.0, %v1268
        %v1333 = vsub.f32 0.0, %v1269
        %v1334 = vsub.f32 0.0, %v1270
        %v1335 = vsub.f32 0.0, %v1271
        %v1336 = vsub.f32 0.0, %v1272
        %v1337 = vsub.f32 0.0, %v1273
        %v1338 = vsub.f32 0.0, %v1274
        %v1339 = vsub.f32 0.0, %v1275
        %v1340 = vsub.f32 0.0, %v1276
        %v1341 = vsub.f32 0.0, %v1277
        %v1342 = vsub.f32 0.0, %v1278
        %v1343 = vsub.f32 0.0, %v1279
        %v1344 = vsub.f32 0.0, %v1280
        %v1345 = vsub.f32 0.0, %v1281
        %v1346 = vsub.f32 0.0, %v1282
        %v1347 = vsel %vm1283, %v1315, %v1251
        %v1348 = vsel %vm1284, %v1316, %v1252
        %v1349 = vsel %vm1285, %v1317, %v1253
        %v1350 = vsel %vm1286, %v1318, %v1254
        %v1351 = vsel %vm1287, %v1319, %v1255
        %v1352 = vsel %vm1288, %v1320, %v1256
        %v1353 = vsel %vm1289, %v1321, %v1257
        %v1354 = vsel %vm1290, %v1322, %v1258
        %v1355 = vsel %vm1291, %v1323, %v1259
        %v1356 = vsel %vm1292, %v1324, %v1260
        %v1357 = vsel %vm1293, %v1325, %v1261
        %v1358 = vsel %vm1294, %v1326, %v1262
        %v1359 = vsel %vm1295, %v1327, %v1263
        %v1360 = vsel %vm1296, %v1328, %v1264
        %v1361 = vsel %vm1297, %v1329, %v1265
        %v1362 = vsel %vm1298, %v1330, %v1266
        %v1363 = vsel %vm1299, %v1331, %v1267
        %v1364 = vsel %vm1300, %v1332, %v1268
        %v1365 = vsel %vm1301, %v1333, %v1269
        %v1366 = vsel %vm1302, %v1334, %v1270
        %v1367 = vsel %vm1303, %v1335, %v1271
        %v1368 = vsel %vm1304, %v1336, %v1272
        %v1369 = vsel %vm1305, %v1337, %v1273
        %v1370 = vsel %vm1306, %v1338, %v1274
        %v1371 = vsel %vm1307, %v1339, %v1275
        %v1372 = vsel %vm1308, %v1340, %v1276
        %v1373 = vsel %vm1309, %v1341, %v1277
        %v1374 = vsel %vm1310, %v1342, %v1278
        %v1375 = vsel %vm1311, %v1343, %v1279
        %v1376 = vsel %vm1312, %v1344, %v1280
        %v1377 = vsel %vm1313, %v1345, %v1281
        %v1378 = vsel %vm1314, %v1346, %v1282
        %v1379 = vadd.f32 %v1347, 1.0
        %v1380 = vadd.f32 %v1348, 1.0
        %v1381 = vadd.f32 %v1349, 1.0
        %v1382 = vadd.f32 %v1350, 1.0
        %v1383 = vadd.f32 %v1351, 1.0
        %v1384 = vadd.f32 %v1352, 1.0
        %v1385 = vadd.f32 %v1353, 1.0
        %v1386 = vadd.f32 %v1354, 1.0
        %v1387 = vadd.f32 %v1355, 1.0
        %v1388 = vadd.f32 %v1356, 1.0
        %v1389 = vadd.f32 %v1357, 1.0
        %v1390 = vadd.f32 %v1358, 1.0
        %v1391 = vadd.f32 %v1359, 1.0
        %v1392 = vadd.f32 %v1360, 1.0
        %v1393 = vadd.f32 %v1361, 1.0
        %v1394 = vadd.f32 %v1362, 1.0
        %v1395 = vadd.f32 %v1363, 1.0
        %v1396 = vadd.f32 %v1364, 1.0
        %v1397 = vadd.f32 %v1365, 1.0
        %v1398 = vadd.f32 %v1366, 1.0
        %v1399 = vadd.f32 %v1367, 1.0
        %v1400 = vadd.f32 %v1368, 1.0
        %v1401 = vadd.f32 %v1369, 1.0
        %v1402 = vadd.f32 %v1370, 1.0
        %v1403 = vadd.f32 %v1371, 1.0
        %v1404 = vadd.f32 %v1372, 1.0
        %v1405 = vadd.f32 %v1373, 1.0
        %v1406 = vadd.f32 %v1374, 1.0
        %v1407 = vadd.f32 %v1375, 1.0
        %v1408 = vadd.f32 %v1376, 1.0
        %v1409 = vadd.f32 %v1377, 1.0
        %v1410 = vadd.f32 %v1378, 1.0
        %v1411 = vmul.f32 %v579, %v1379
        %v1412 = vmul.f32 %v580, %v1380
        %v1413 = vmul.f32 %v581, %v1381
        %v1414 = vmul.f32 %v582, %v1382
        %v1415 = vmul.f32 %v583, %v1383
        %v1416 = vmul.f32 %v584, %v1384
        %v1417 = vmul.f32 %v585, %v1385
        %v1418 = vmul.f32 %v586, %v1386
        %v1419 = vmul.f32 %v587, %v1387
        %v1420 = vmul.f32 %v588, %v1388
        %v1421 = vmul.f32 %v589, %v1389
        %v1422 = vmul.f32 %v590, %v1390
        %v1423 = vmul.f32 %v591, %v1391
        %v1424 = vmul.f32 %v592, %v1392
        %v1425 = vmul.f32 %v593, %v1393
        %v1426 = vmul.f32 %v594, %v1394
        %v1427 = vmul.f32 %v595, %v1395
        %v1428 = vmul.f32 %v596, %v1396
        %v1429 = vmul.f32 %v597, %v1397
        %v1430 = vmul.f32 %v598, %v1398
        %v1431 = vmul.f32 %v599, %v1399
        %v1432 = vmul.f32 %v600, %v1400
        %v1433 = vmul.f32 %v601, %v1401
        %v1434 = vmul.f32 %v602, %v1402
        %v1435 = vmul.f32 %v603, %v1403
        %v1436 = vmul.f32 %v604, %v1404
        %v1437 = vmul.f32 %v605, %v1405
        %v1438 = vmul.f32 %v606, %v1406
        %v1439 = vmul.f32 %v607, %v1407
        %v1440 = vmul.f32 %v608, %v1408
        %v1441 = vmul.f32 %v609, %v1409
        %v1442 = vmul.f32 %v610, %v1410
        %v1443 = vmax.f32 %v1411, %v1419
        %v1444 = vmax.f32 %v1412, %v1420
        %v1445 = vmax.f32 %v1413, %v1421
        %v1446 = vmax.f32 %v1414, %v1422
        %v1447 = vmax.f32 %v1415, %v1423
        %v1448 = vmax.f32 %v1416, %v1424
        %v1449 = vmax.f32 %v1417, %v1425
        %v1450 = vmax.f32 %v1418, %v1426
        %v1451 = vmax.f32 %v1427, %v1435
        %v1452 = vmax.f32 %v1428, %v1436
        %v1453 = vmax.f32 %v1429, %v1437
        %v1454 = vmax.f32 %v1430, %v1438
        %v1455 = vmax.f32 %v1431, %v1439
        %v1456 = vmax.f32 %v1432, %v1440
        %v1457 = vmax.f32 %v1433, %v1441
        %v1458 = vmax.f32 %v1434, %v1442
        %v1459 = vmax.f32 %v1443, %v1451
        %v1460 = vmax.f32 %v1444, %v1452
        %v1461 = vmax.f32 %v1445, %v1453
        %v1462 = vmax.f32 %v1446, %v1454
        %v1463 = vmax.f32 %v1447, %v1455
        %v1464 = vmax.f32 %v1448, %v1456
        %v1465 = vmax.f32 %v1449, %v1457
        %v1466 = vmax.f32 %v1450, %v1458
        %v1467 = vpack.c.bf16 %v1460, %v1459
        %v1468 = vpack.c.bf16 %v1462, %v1461
        %v1469 = vpack.c.bf16 %v1464, %v1463
        %v1470 = vpack.c.bf16 %v1466, %v1465
        %vm1471 = vsmask.f32 4352
        %v1473 = vshrl.u32 %v1467, 16
        %v1475 = vrot.slane %v1473, 3
        %v1476 = vshll.u32 %v1467, 16
        %v1478 = vrot.slane %v1476, 4
        %v1479 = vor.u32 %v1475, %v1478
        %v1481 = vshrl.u32 %v1468, 16
        %v1483 = vrot.slane %v1481, 3
        %v1484 = vshll.u32 %v1468, 16
        %v1486 = vrot.slane %v1484, 4
        %v1487 = vor.u32 %v1483, %v1486
        %v1488 = vsel %vm1471, %v1479, %v1487
        %v1490 = vshrl.u32 %v1469, 16
        %v1492 = vrot.slane %v1490, 3
        %v1493 = vshll.u32 %v1469, 16
        %v1495 = vrot.slane %v1493, 4
        %v1496 = vor.u32 %v1492, %v1495
        %v1497 = vsel %vm1471, %v1487, %v1496
        %v1499 = vshrl.u32 %v1470, 16
        %v1501 = vrot.slane %v1499, 3
        %v1502 = vshll.u32 %v1470, 16
        %v1504 = vrot.slane %v1502, 4
        %v1505 = vor.u32 %v1501, %v1504
        %v1506 = vsel %vm1471, %v1496, %v1505
        %vm1512 = vcmask 1044480
        %vm1513 = vmand %vm1512, %vm1471
        %v1514 = vsel %vm1513, 0, %v1479
        %v1515 = vsel %vm1513, %v1505, 0
        %v1516 = vlaneseq
        %v1517 = vshrl.u32 %v1516, 7
        %v1518 = vadd.s32 %v1517, 8
        %v1519 = vadd.s32 %v1517, 16
        %v1520 = vadd.s32 %v1517, 24
        %v1521 = vadd.s32 %v1517, 32
        %v1522 = vadd.s32 %v1517, 40
        %v1523 = vadd.s32 %v1517, 48
        %v1524 = vadd.s32 %v1517, 56
        %vm1525 = vcmp.lt.s32.totalorder %v1517, 0
        %v1526 = vsub.s32 0, %v1517
        %v1527 = vsel %vm1525, %v1526, %v1517
        %v1528 = vshrl.u32 %v1527, 3
        %v1529 = vand.u32 %v1527, 7
        %v1530 = vsub.s32 0, %v1529
        %v1531 = vsel %vm1525, %v1530, %v1529
        %vm1532 = vcmp.lt.s32.totalorder %v1518, 0
        %v1533 = vsub.s32 0, %v1518
        %v1534 = vsel %vm1532, %v1533, %v1518
        %v1535 = vshrl.u32 %v1534, 3
        %v1536 = vand.u32 %v1534, 7
        %v1537 = vsub.s32 0, %v1536
        %v1538 = vsel %vm1532, %v1537, %v1536
        %vm1539 = vcmp.lt.s32.totalorder %v1519, 0
        %v1540 = vsub.s32 0, %v1519
        %v1541 = vsel %vm1539, %v1540, %v1519
        %v1542 = vshrl.u32 %v1541, 3
        %v1543 = vand.u32 %v1541, 7
        %v1544 = vsub.s32 0, %v1543
        %v1545 = vsel %vm1539, %v1544, %v1543
        %vm1546 = vcmp.lt.s32.totalorder %v1520, 0
        %v1547 = vsub.s32 0, %v1520
        %v1548 = vsel %vm1546, %v1547, %v1520
        %v1549 = vshrl.u32 %v1548, 3
        %v1550 = vand.u32 %v1548, 7
        %v1551 = vsub.s32 0, %v1550
        %v1552 = vsel %vm1546, %v1551, %v1550
        %vm1553 = vcmp.lt.s32.totalorder %v1521, 0
        %v1554 = vsub.s32 0, %v1521
        %v1555 = vsel %vm1553, %v1554, %v1521
        %v1556 = vshrl.u32 %v1555, 3
        %v1557 = vand.u32 %v1555, 7
        %v1558 = vsub.s32 0, %v1557
        %v1559 = vsel %vm1553, %v1558, %v1557
        %vm1560 = vcmp.lt.s32.totalorder %v1522, 0
        %v1561 = vsub.s32 0, %v1522
        %v1562 = vsel %vm1560, %v1561, %v1522
        %v1563 = vshrl.u32 %v1562, 3
        %v1564 = vand.u32 %v1562, 7
        %v1565 = vsub.s32 0, %v1564
        %v1566 = vsel %vm1560, %v1565, %v1564
        %vm1567 = vcmp.lt.s32.totalorder %v1523, 0
        %v1568 = vsub.s32 0, %v1523
        %v1569 = vsel %vm1567, %v1568, %v1523
        %v1570 = vshrl.u32 %v1569, 3
        %v1571 = vand.u32 %v1569, 7
        %v1572 = vsub.s32 0, %v1571
        %v1573 = vsel %vm1567, %v1572, %v1571
        %vm1574 = vcmp.lt.s32.totalorder %v1524, 0
        %v1575 = vsub.s32 0, %v1524
        %v1576 = vsel %vm1574, %v1575, %v1524
        %v1577 = vshrl.u32 %v1576, 3
        %v1578 = vand.u32 %v1576, 7
        %v1579 = vsub.s32 0, %v1578
        %v1580 = vsel %vm1574, %v1579, %v1578
        %vm1581 = vcmp.ne.s32.totalorder %v1531, 0
        %vm1582 = vcmp.ne.s32.totalorder %v1538, 0
        %vm1583 = vcmp.ne.s32.totalorder %v1545, 0
        %vm1584 = vcmp.ne.s32.totalorder %v1552, 0
        %vm1585 = vcmp.ne.s32.totalorder %v1559, 0
        %vm1586 = vcmp.ne.s32.totalorder %v1566, 0
        %vm1587 = vcmp.ne.s32.totalorder %v1573, 0
        %vm1588 = vcmp.ne.s32.totalorder %v1580, 0
        %vm1589 = vcmp.lt.s32.totalorder %v1531, 0
        %vm1590 = vcmp.lt.s32.totalorder %v1538, 0
        %vm1591 = vcmp.lt.s32.totalorder %v1545, 0
        %vm1592 = vcmp.lt.s32.totalorder %v1552, 0
        %vm1593 = vcmp.lt.s32.totalorder %v1559, 0
        %vm1594 = vcmp.lt.s32.totalorder %v1566, 0
        %vm1595 = vcmp.lt.s32.totalorder %v1573, 0
        %vm1596 = vcmp.lt.s32.totalorder %v1580, 0
        %vm1597 = vmand %vm1589, %vm1581
        %vm1598 = vmand %vm1590, %vm1582
        %vm1599 = vmand %vm1591, %vm1583
        %vm1600 = vmand %vm1592, %vm1584
        %vm1601 = vmand %vm1593, %vm1585
        %vm1602 = vmand %vm1594, %vm1586
        %vm1603 = vmand %vm1595, %vm1587
        %vm1604 = vmand %vm1596, %vm1588
        %v1605 = vadd.s32 %v1531, 8
        %v1606 = vadd.s32 %v1538, 8
        %v1607 = vadd.s32 %v1545, 8
        %v1608 = vadd.s32 %v1552, 8
        %v1609 = vadd.s32 %v1559, 8
        %v1610 = vadd.s32 %v1566, 8
        %v1611 = vadd.s32 %v1573, 8
        %v1612 = vadd.s32 %v1580, 8
        %v1613 = vsel %vm1597, %v1605, %v1531
        %v1614 = vsel %vm1598, %v1606, %v1538
        %v1615 = vsel %vm1599, %v1607, %v1545
        %v1616 = vsel %vm1600, %v1608, %v1552
        %v1617 = vsel %vm1601, %v1609, %v1559
        %v1618 = vsel %vm1602, %v1610, %v1566
        %v1619 = vsel %vm1603, %v1611, %v1573
        %v1620 = vsel %vm1604, %v1612, %v1580
        %vm1621 = vcmp.ge.s32.totalorder %v1613, 1
        %vm1622 = vcmp.ge.s32.totalorder %v1614, 1
        %vm1623 = vcmp.ge.s32.totalorder %v1615, 1
        %vm1624 = vcmp.ge.s32.totalorder %v1616, 1
        %vm1625 = vcmp.ge.s32.totalorder %v1617, 1
        %vm1626 = vcmp.ge.s32.totalorder %v1618, 1
        %vm1627 = vcmp.ge.s32.totalorder %v1619, 1
        %vm1628 = vcmp.ge.s32.totalorder %v1620, 1
        %vm1629 = vcmp.le.s32.totalorder %v1613, 6
        %vm1630 = vcmp.le.s32.totalorder %v1614, 6
        %vm1631 = vcmp.le.s32.totalorder %v1615, 6
        %vm1632 = vcmp.le.s32.totalorder %v1616, 6
        %vm1633 = vcmp.le.s32.totalorder %v1617, 6
        %vm1634 = vcmp.le.s32.totalorder %v1618, 6
        %vm1635 = vcmp.le.s32.totalorder %v1619, 6
        %vm1636 = vcmp.le.s32.totalorder %v1620, 6
        %vm1637 = vmpackc.low %vm1621, %vm1621
        %vm1638 = vmpackc.low %vm1622, %vm1622
        %vm1639 = vmpackc.low %vm1623, %vm1623
        %vm1640 = vmpackc.low %vm1624, %vm1624
        %vm1641 = vmpackc.low %vm1625, %vm1625
        %vm1642 = vmpackc.low %vm1626, %vm1626
        %vm1643 = vmpackc.low %vm1627, %vm1627
        %vm1644 = vmpackc.low %vm1628, %vm1628
        %v1645 = vsel %vm1637, 65537, 0
        %v1646 = vsel %vm1638, 65537, 0
        %v1647 = vsel %vm1639, 65537, 0
        %v1648 = vsel %vm1640, 65537, 0
        %v1649 = vsel %vm1641, 65537, 0
        %v1650 = vsel %vm1642, 65537, 0
        %v1651 = vsel %vm1643, 65537, 0
        %v1652 = vsel %vm1644, 65537, 0
        %v1653 = vunpack.c.l.b16 %v1645
        %v1654 = vunpack.c.l.b16 %v1646
        %v1655 = vunpack.c.l.b16 %v1647
        %v1656 = vunpack.c.l.b16 %v1648
        %v1657 = vunpack.c.l.b16 %v1649
        %v1658 = vunpack.c.l.b16 %v1650
        %v1659 = vunpack.c.l.b16 %v1651
        %v1660 = vunpack.c.l.b16 %v1652
        %v1661 = vpack.c.b16 %v1654, %v1653
        %v1662 = vpack.c.b16 %v1656, %v1655
        %v1663 = vpack.c.b16 %v1658, %v1657
        %v1664 = vpack.c.b16 %v1660, %v1659
        %vm1665 = vcmp.ne.s16.totalorder %v1661, 0
        %vm1666 = vcmp.ne.s16.totalorder %v1662, 0
        %vm1667 = vcmp.ne.s16.totalorder %v1663, 0
        %vm1668 = vcmp.ne.s16.totalorder %v1664, 0
        %v1669 = vsel %vm1665, %v1514, 0
        %v1670 = vsel %vm1666, %v1488, 0
        %v1671 = vsel %vm1667, %v1497, 0
        %v1672 = vsel %vm1668, %v1506, 0
        %vm1673 = vmpackc.low %vm1629, %vm1629
        %vm1674 = vmpackc.low %vm1630, %vm1630
        %vm1675 = vmpackc.low %vm1631, %vm1631
        %vm1676 = vmpackc.low %vm1632, %vm1632
        %vm1677 = vmpackc.low %vm1633, %vm1633
        %vm1678 = vmpackc.low %vm1634, %vm1634
        %vm1679 = vmpackc.low %vm1635, %vm1635
        %vm1680 = vmpackc.low %vm1636, %vm1636
        %v1681 = vsel %vm1673, 65537, 0
        %v1682 = vsel %vm1674, 65537, 0
        %v1683 = vsel %vm1675, 65537, 0
        %v1684 = vsel %vm1676, 65537, 0
        %v1685 = vsel %vm1677, 65537, 0
        %v1686 = vsel %vm1678, 65537, 0
        %v1687 = vsel %vm1679, 65537, 0
        %v1688 = vsel %vm1680, 65537, 0
        %v1689 = vunpack.c.l.b16 %v1681
        %v1690 = vunpack.c.l.b16 %v1682
        %v1691 = vunpack.c.l.b16 %v1683
        %v1692 = vunpack.c.l.b16 %v1684
        %v1693 = vunpack.c.l.b16 %v1685
        %v1694 = vunpack.c.l.b16 %v1686
        %v1695 = vunpack.c.l.b16 %v1687
        %v1696 = vunpack.c.l.b16 %v1688
        %v1697 = vpack.c.b16 %v1690, %v1689
        %v1698 = vpack.c.b16 %v1692, %v1691
        %v1699 = vpack.c.b16 %v1694, %v1693
        %v1700 = vpack.c.b16 %v1696, %v1695
        %vm1701 = vcmask 1040384
        %v1702 = vrot.slane %v1697, 7
        %v1703 = vrot.slane %v1698, 7
        %v1704 = vsel %vm1701, %v1702, %v1703
        %v1705 = vrot.slane %v1699, 7
        %v1706 = vsel %vm1701, %v1703, %v1705
        %v1707 = vrot.slane %v1700, 7
        %v1708 = vsel %vm1701, %v1705, %v1707
        %vm1709 = vcmp.ne.s16.totalorder %v1702, 0
        %vm1710 = vcmp.ne.s16.totalorder %v1704, 0
        %vm1711 = vcmp.ne.s16.totalorder %v1706, 0
        %vm1712 = vcmp.ne.s16.totalorder %v1708, 0
        %vm1713 = vcmp.ne.s16.totalorder %v1707, 0
        %v1714 = vsel %vm1709, %v1514, 0
        %v1715 = vsel %vm1710, %v1488, 0
        %v1716 = vsel %vm1711, %v1497, 0
        %v1717 = vsel %vm1712, %v1506, 0
        %v1718 = vsel %vm1713, %v1515, 0
        %v1719 = vpack.c.b16 %v1653, %v1653
        %v1720 = vpack.c.b16 %v1655, %v1654
        %v1721 = vpack.c.b16 %v1657, %v1656
        %v1722 = vpack.c.b16 %v1659, %v1658
        %v1723 = vpack.c.b16 %v1660, %v1660
        %vm1724 = vcmp.ne.s16.totalorder %v1719, 0
        %vm1725 = vcmp.ne.s16.totalorder %v1720, 0
        %vm1726 = vcmp.ne.s16.totalorder %v1721, 0
        %vm1727 = vcmp.ne.s16.totalorder %v1722, 0
        %vm1728 = vcmp.ne.s16.totalorder %v1723, 0
        %v1729 = vsel %vm1724, %v1514, 0
        %v1730 = vsel %vm1725, %v1488, 0
        %v1731 = vsel %vm1726, %v1497, 0
        %v1732 = vsel %vm1727, %v1506, 0
        %v1733 = vsel %vm1728, %v1515, 0
        %v1734 = vrot.slane %v1697, 3
        %v1735 = vrot.slane %v1698, 3
        %v1736 = vsel %vm1512, %v1734, %v1735
        %v1737 = vrot.slane %v1699, 3
        %v1738 = vsel %vm1512, %v1735, %v1737
        %v1739 = vrot.slane %v1700, 3
        %v1740 = vsel %vm1512, %v1737, %v1739
        %vm1741 = vcmp.ne.s16.totalorder %v1734, 0
        %vm1742 = vcmp.ne.s16.totalorder %v1736, 0
        %vm1743 = vcmp.ne.s16.totalorder %v1738, 0
        %vm1744 = vcmp.ne.s16.totalorder %v1740, 0
        %vm1745 = vcmp.ne.s16.totalorder %v1739, 0
        %v1746 = vsel %vm1741, %v1514, 0
        %v1747 = vsel %vm1742, %v1488, 0
        %v1748 = vsel %vm1743, %v1497, 0
        %v1749 = vsel %vm1744, %v1506, 0
        %v1750 = vsel %vm1745, %v1515, 0
        %v1751 = vsel %vm1665, %v1488, 0
        %v1752 = vsel %vm1666, %v1497, 0
        %v1753 = vsel %vm1667, %v1506, 0
        %v1754 = vsel %vm1668, %v1515, 0
        %v1755 = vsel %vm1709, %v1488, 0
        %v1756 = vsel %vm1710, %v1497, 0
        %v1757 = vsel %vm1711, %v1506, 0
        %v1758 = vsel %vm1712, %v1515, 0
        %vm1759 = vsmask.f32 7424
        %v1761 = vshrl.u32 %v1514, 16
        %v1763 = vshll.u32 %v1514, 16
        %v1765 = vrot.slane %v1763, 1
        %v1766 = vor.u32 %v1761, %v1765
        %v1768 = vshll.u32 %v1488, 16
        %v1770 = vrot.slane %v1768, 1
        %v1771 = vsel %vm1759, %v1766, %v1770
        %v1772 = vshrl.u32 %v1488, 16
        %v1774 = vor.u32 %v1772, %v1770
        %v1776 = vshll.u32 %v1497, 16
        %v1778 = vrot.slane %v1776, 1
        %v1779 = vsel %vm1759, %v1774, %v1778
        %v1780 = vshrl.u32 %v1497, 16
        %v1782 = vor.u32 %v1780, %v1778
        %v1784 = vshll.u32 %v1506, 16
        %v1786 = vrot.slane %v1784, 1
        %v1787 = vsel %vm1759, %v1782, %v1786
        %v1788 = vshrl.u32 %v1506, 16
        %v1790 = vor.u32 %v1788, %v1786
        %v1792 = vshll.u32 %v1515, 16
        %v1794 = vrot.slane %v1792, 1
        %v1795 = vsel %vm1759, %v1790, %v1794
        %1796 = vrot.lane.b32.xlu0 %v1771, 16
        %v1797 = vpop.permute.xlu0 %1796
        %1798 = vrot.lane.b32.xlu0 %v1779, 16
        %v1799 = vpop.permute.xlu0 %1798
        %1800 = vrot.lane.b32.xlu0 %v1787, 16
        %v1801 = vpop.permute.xlu0 %1800
        %1802 = vrot.lane.b32.xlu0 %v1795, 16
        %v1803 = vpop.permute.xlu0 %1802
        %vm1809 = vcmask 1046528
        %v1810 = vrot.slane %v1714, 1
        %v1811 = vrot.slane %v1715, 1
        %v1812 = vsel %vm1809, %v1810, %v1811
        %v1813 = vrot.slane %v1716, 1
        %v1814 = vsel %vm1809, %v1811, %v1813
        %v1815 = vrot.slane %v1717, 1
        %v1816 = vsel %vm1809, %v1813, %v1815
        %v1817 = vrot.slane %v1718, 1
        %v1818 = vsel %vm1809, %v1815, %v1817
        %1819 = vrot.lane.b32.xlu0 %v1812, 32
        %v1820 = vpop.permute.xlu0 %1819
        %1821 = vrot.lane.b32.xlu0 %v1814, 32
        %v1822 = vpop.permute.xlu0 %1821
        %1823 = vrot.lane.b32.xlu0 %v1816, 32
        %v1824 = vpop.permute.xlu0 %1823
        %1825 = vrot.lane.b32.xlu0 %v1818, 32
        %v1826 = vpop.permute.xlu0 %1825
        %vm1832 = vcmask 1043456
        %v1833 = vrot.slane %v1729, 4
        %v1834 = vrot.slane %v1730, 4
        %v1835 = vsel %vm1832, %v1833, %v1834
        %v1836 = vrot.slane %v1731, 4
        %v1837 = vsel %vm1832, %v1834, %v1836
        %v1838 = vrot.slane %v1732, 4
        %v1839 = vsel %vm1832, %v1836, %v1838
        %v1840 = vrot.slane %v1733, 4
        %v1841 = vsel %vm1832, %v1838, %v1840
        %1842 = vrot.lane.b32.xlu0 %v1835, 48
        %v1843 = vpop.permute.xlu0 %1842
        %1844 = vrot.lane.b32.xlu0 %v1837, 48
        %v1845 = vpop.permute.xlu0 %1844
        %1846 = vrot.lane.b32.xlu0 %v1839, 48
        %v1847 = vpop.permute.xlu0 %1846
        %1848 = vrot.lane.b32.xlu0 %v1841, 48
        %v1849 = vpop.permute.xlu0 %1848
        %vm1850 = vsmask.f32 3328
        %v1851 = vrot.slane %v1761, 4
        %v1852 = vrot.slane %v1763, 5
        %v1853 = vor.u32 %v1851, %v1852
        %v1854 = vrot.slane %v1772, 4
        %v1855 = vrot.slane %v1768, 5
        %v1856 = vor.u32 %v1854, %v1855
        %v1857 = vsel %vm1850, %v1853, %v1856
        %v1858 = vrot.slane %v1780, 4
        %v1859 = vrot.slane %v1776, 5
        %v1860 = vor.u32 %v1858, %v1859
        %v1861 = vsel %vm1850, %v1856, %v1860
        %v1862 = vrot.slane %v1788, 4
        %v1863 = vrot.slane %v1784, 5
        %v1864 = vor.u32 %v1862, %v1863
        %v1865 = vsel %vm1850, %v1860, %v1864
        %v1866 = vshrl.u32 %v1515, 16
        %v1868 = vrot.slane %v1866, 4
        %v1869 = vrot.slane %v1792, 5
        %v1870 = vor.u32 %v1868, %v1869
        %v1871 = vsel %vm1850, %v1864, %v1870
        %1872 = vrot.lane.b32.xlu0 %v1857, 64
        %v1873 = vpop.permute.xlu0 %1872
        %1874 = vrot.lane.b32.xlu0 %v1861, 64
        %v1875 = vpop.permute.xlu0 %1874
        %1876 = vrot.lane.b32.xlu0 %v1865, 64
        %v1877 = vpop.permute.xlu0 %1876
        %1878 = vrot.lane.b32.xlu0 %v1871, 64
        %v1879 = vpop.permute.xlu0 %1878
        %vm1885 = vcmask 1042432
        %v1886 = vrot.slane %v1746, 5
        %v1887 = vrot.slane %v1747, 5
        %v1888 = vsel %vm1885, %v1886, %v1887
        %v1889 = vrot.slane %v1748, 5
        %v1890 = vsel %vm1885, %v1887, %v1889
        %v1891 = vrot.slane %v1749, 5
        %v1892 = vsel %vm1885, %v1889, %v1891
        %v1893 = vrot.slane %v1750, 5
        %v1894 = vsel %vm1885, %v1891, %v1893
        %1895 = vrot.lane.b32.xlu0 %v1888, 80
        %v1896 = vpop.permute.xlu0 %1895
        %1897 = vrot.lane.b32.xlu0 %v1890, 80
        %v1898 = vpop.permute.xlu0 %1897
        %1899 = vrot.lane.b32.xlu0 %v1892, 80
        %v1900 = vpop.permute.xlu0 %1899
        %1901 = vrot.lane.b32.xlu0 %v1894, 80
        %v1902 = vpop.permute.xlu0 %1901
        %1907 = vrot.lane.b32.xlu0 %v1751, 96
        %v1908 = vpop.permute.xlu0 %1907
        %1909 = vrot.lane.b32.xlu0 %v1752, 96
        %v1910 = vpop.permute.xlu0 %1909
        %1911 = vrot.lane.b32.xlu0 %v1753, 96
        %v1912 = vpop.permute.xlu0 %1911
        %1913 = vrot.lane.b32.xlu0 %v1754, 96
        %v1914 = vpop.permute.xlu0 %1913
        %v1915 = vor.u32 %v1866, %v1794
        %v1917 = vshll.u32 0, 16
        %v1919 = vrot.slane %v1917, 1
        %v1920 = vsel %vm1759, %v1915, %v1919
        %1921 = vrot.lane.b32.xlu0 %v1779, 112
        %v1922 = vpop.permute.xlu0 %1921
        %1923 = vrot.lane.b32.xlu0 %v1787, 112
        %v1924 = vpop.permute.xlu0 %1923
        %1925 = vrot.lane.b32.xlu0 %v1795, 112
        %v1926 = vpop.permute.xlu0 %1925
        %1927 = vrot.lane.b32.xlu0 %v1920, 112
        %v1928 = vpop.permute.xlu0 %1927
        %v1934 = vrot.slane %v1755, 1
        %v1935 = vrot.slane %v1756, 1
        %v1936 = vsel %vm1809, %v1934, %v1935
        %v1937 = vrot.slane %v1757, 1
        %v1938 = vsel %vm1809, %v1935, %v1937
        %v1939 = vrot.slane %v1758, 1
        %v1940 = vsel %vm1809, %v1937, %v1939
        %v1941 = vrot.slane 0, 1
        %v1942 = vsel %vm1809, %v1939, %v1941
        %vm1943 = vcmask 130048
        %v1946 = vsel %vm1943, %v1669, %v1797
        %v1949 = vsel %vm1943, %v1670, %v1799
        %v1952 = vsel %vm1943, %v1671, %v1801
        %v1955 = vsel %vm1943, %v1672, %v1803
        %vm1956 = vcmask 261120
        %v1958 = vsel %vm1956, %v1946, %v1820
        %v1960 = vsel %vm1956, %v1949, %v1822
        %v1962 = vsel %vm1956, %v1952, %v1824
        %v1964 = vsel %vm1956, %v1955, %v1826
        %vm1965 = vcmask 392192
        %v1967 = vsel %vm1965, %v1958, %v1843
        %v1969 = vsel %vm1965, %v1960, %v1845
        %v1971 = vsel %vm1965, %v1962, %v1847
        %v1973 = vsel %vm1965, %v1964, %v1849
        %vm1974 = vcmask 523264
        %v1976 = vsel %vm1974, %v1967, %v1873
        %v1978 = vsel %vm1974, %v1969, %v1875
        %v1980 = vsel %vm1974, %v1971, %v1877
        %v1982 = vsel %vm1974, %v1973, %v1879
        %vm1983 = vcmask 654336
        %v1985 = vsel %vm1983, %v1976, %v1896
        %v1987 = vsel %vm1983, %v1978, %v1898
        %v1989 = vsel %vm1983, %v1980, %v1900
        %v1991 = vsel %vm1983, %v1982, %v1902
        %vm1992 = vcmask 785408
        %v1994 = vsel %vm1992, %v1985, %v1908
        %v1996 = vsel %vm1992, %v1987, %v1910
        %v1998 = vsel %vm1992, %v1989, %v1912
        %v2000 = vsel %vm1992, %v1991, %v1914
        %vm2001 = vcmask 916480
        %v2003 = vsel %vm2001, %v1994, %v1922
        %v2006 = vsel %vm2001, %v1996, %v1924
        %v2009 = vsel %vm2001, %v1998, %v1926
        %v2012 = vsel %vm2001, %v2000, %v1928
        %v2014 = vld [vmem:[%s3] sm:$0xf]
        %v2015 = vld [vmem:[%s3 + $0x4] sm:$0xf]
        %v2016 = vld [vmem:[%s3 + $0x8] sm:$0xf]
        %v2017 = vld [vmem:[%s3 + $0xc] sm:$0xf]
        %v2018 = vld [vmem:[%s3 + $0x10] sm:$0xf]
        %v2019 = vld [vmem:[%s3 + $0x14] sm:$0xf]
        %v2020 = vld [vmem:[%s3 + $0x18] sm:$0xf]
        %v2021 = vld [vmem:[%s3 + $0x1c] sm:$0xf]
        %v2022 = vld [vmem:[%s3 + $0x20] sm:$0xf]
        %v2023 = vld [vmem:[%s3 + $0x24] sm:$0xf]
        %v2024 = vld [vmem:[%s3 + $0x28] sm:$0xf]
        %v2025 = vld [vmem:[%s3 + $0x2c] sm:$0xf]
        %v2026 = vld [vmem:[%s3 + $0x30] sm:$0xf]
        %v2027 = vld [vmem:[%s3 + $0x34] sm:$0xf]
        %v2028 = vld [vmem:[%s3 + $0x38] sm:$0xf]
        %v2029 = vld [vmem:[%s3 + $0x3c] sm:$0xf]
        %v2030 = vld [vmem:[%s3 + $0x40] sm:$0xf]
        %v2031 = vld [vmem:[%s3 + $0x44] sm:$0xf]
        %v2032 = vld [vmem:[%s4] sm:$0x1]
        %v2034 = vlaneseq
        %v2035 = vshrl.u32 %v2034, 7
        %v2036 = vsub.s32 0, %v2035
        %v2037 = vrot.slane %v2032, %v2036
        %v2057 = vunpack.c.l.b16 %v2014
        %v2058 = vunpack.c.l.b16 %v2015
        %v2059 = vunpack.c.l.b16 %v2016
        %v2060 = vunpack.c.l.b16 %v2017
        %v2061 = vunpack.c.l.b16 %v2018
        %v2062 = vunpack.c.l.b16 %v2019
        %v2063 = vunpack.c.l.b16 %v2020
        %v2064 = vunpack.c.l.b16 %v2021
        %v2065 = vunpack.c.l.b16 %v2022
        %v2066 = vunpack.c.l.b16 %v2023
        %v2067 = vunpack.c.l.b16 %v2024
        %v2068 = vunpack.c.l.b16 %v2025
        %v2069 = vunpack.c.l.b16 %v2026
        %v2070 = vunpack.c.l.b16 %v2027
        %v2071 = vunpack.c.l.b16 %v2028
        %v2072 = vunpack.c.l.b16 %v2029
        %v2073 = vunpack.c.l.b16 %v2030
        %v2074 = vunpack.c.l.b16 %v2031
        %v2075 = vpack.c.b16 %v2058, %v2057
        %v2076 = vpack.c.b16 %v2060, %v2059
        %v2077 = vpack.c.b16 %v2062, %v2061
        %v2078 = vpack.c.b16 %v2064, %v2063
        %v2079 = vpack.c.b16 %v2066, %v2065
        %v2080 = vpack.c.b16 %v2068, %v2067
        %v2081 = vpack.c.b16 %v2070, %v2069
        %v2082 = vpack.c.b16 %v2072, %v2071
        %v2083 = vpack.c.b16 %v2074, %v2073
        %v2094 = vsel %vm1943, %v1936, 0
        %v2097 = vsel %vm1943, %v1938, 0
        %v2100 = vsel %vm1943, %v1940, 0
        %v2103 = vsel %vm1943, %v1942, 0
        %2105 = vmatprep.subr.bf16.mxu0 0
        %2106 = vmatpush1.bf16.msra.mxu0 %v2082
        %2107 = vmatprep.subr.bf16.mxu0 0
        %2108 = vmatpush1.bf16.msra.mxu0 %v2081
        %2109 = vmatprep.subr.bf16.mxu0 0
        %2110 = vmatpush1.bf16.msra.mxu0 %v2080
        %2111 = vmatprep.subr.bf16.mxu0 0
        %2112 = vmatpush1.bf16.msra.mxu0 %v2079
        %2113 = vmatprep.subr.bf16.mxu0 0
        %2114 = vmatpush1.bf16.msra.mxu0 %v2078
        %2115 = vmatprep.subr.bf16.mxu0 0
        %2116 = vmatpush1.bf16.msra.mxu0 %v2077
        %2117 = vmatprep.subr.bf16.mxu0 0
        %2118 = vmatpush1.bf16.msra.mxu0 %v2076
        %2119 = vmatprep.subr.bf16.mxu0 0
        %2120 = vmatpush1.bf16.msra.mxu0 %v2075
        %2121 = vmatprep.subr.bf16.mxu0 0
        %2122 = vmatpush2.bf16.msra.mxu0 0
        %2123 = vmatprep.subr.bf16.mxu0 0
        %2124 = vmatpush2.bf16.msra.mxu0 0
        %2125 = vmatprep.subr.bf16.mxu0 0
        %2126 = vmatpush2.bf16.msra.mxu0 0
        %2127 = vmatprep.subr.bf16.mxu0 0
        %2128 = vmatpush2.bf16.msra.mxu0 0
        %2129 = vmatprep.subr.bf16.mxu0 0
        %2130 = vmatpush2.bf16.msra.mxu0 0
        %2131 = vmatprep.subr.bf16.mxu0 0
        %2132 = vmatpush2.bf16.msra.mxu0 0
        %2133 = vmatprep.subr.bf16.mxu0 0
        %2134 = vmatpush2.bf16.msra.mxu0 0
        %2135 = vmatprep.subr.bf16.mxu0 0
        %2136 = vmatpush2.bf16.msra.mxu0 %v2083
        %2137 = vmatprep.mubr.bf16.mxu0 %v2094
        %2138 = vmatmul.mubr.bf16.gmra.mxu0 %v2003
        %v2139 = vpop.f32.mrf.mxu0
        %v2140 = vadd.f32 %v2037, %v2139
        %v2141 = vpop.f32.mrf.mxu0
        %v2142 = vpop.f32.mrf.mxu0
        %v2143 = vadd.f32 %v2037, %v2142
        %v2144 = vpop.f32.mrf.mxu0
        %2145 = vmatprep.mubr.bf16.mxu0 %v2097
        %2146 = vmatmul.mubr.bf16.gmra.mxu0 %v2006
        %v2147 = vpop.f32.mrf.mxu0
        %v2148 = vadd.f32 %v2037, %v2147
        %v2149 = vpop.f32.mrf.mxu0
        %v2150 = vpop.f32.mrf.mxu0
        %v2151 = vadd.f32 %v2037, %v2150
        %v2152 = vpop.f32.mrf.mxu0
        %2153 = vmatprep.mubr.bf16.mxu0 %v2100
        %2154 = vmatmul.mubr.bf16.gmra.mxu0 %v2009
        %v2155 = vpop.f32.mrf.mxu0
        %v2156 = vadd.f32 %v2037, %v2155
        %v2157 = vpop.f32.mrf.mxu0
        %v2158 = vpop.f32.mrf.mxu0
        %v2159 = vadd.f32 %v2037, %v2158
        %v2160 = vpop.f32.mrf.mxu0
        %2161 = vmatprep.mubr.bf16.mxu0 %v2103
        %2162 = vmatmul.mubr.bf16.gmra.mxu0 %v2012
        %v2163 = vpop.f32.mrf.mxu0
        %v2164 = vadd.f32 %v2037, %v2163
        %v2165 = vpop.f32.mrf.mxu0
        %v2166 = vpop.f32.mrf.mxu0
        %v2167 = vadd.f32 %v2037, %v2166
        %v2168 = vpop.f32.mrf.mxu0
        %2169 = vdwg.mxu0
        %v2170 = vmul.f32 %v2140, 0.5
        %v2171 = vmul.f32 %v2143, 0.5
        %v2172 = vmul.f32 %v2148, 0.5
        %v2173 = vmul.f32 %v2151, 0.5
        %v2174 = vmul.f32 %v2156, 0.5
        %v2175 = vmul.f32 %v2159, 0.5
        %v2176 = vmul.f32 %v2164, 0.5
        %v2177 = vmul.f32 %v2167, 0.5
        %v2178 = vmul.f32 %v2140, 0.70710677
        %v2179 = vmul.f32 %v2143, 0.70710677
        %v2180 = vmul.f32 %v2148, 0.70710677
        %v2181 = vmul.f32 %v2151, 0.70710677
        %v2182 = vmul.f32 %v2156, 0.70710677
        %v2183 = vmul.f32 %v2159, 0.70710677
        %v2184 = vmul.f32 %v2164, 0.70710677
        %v2185 = vmul.f32 %v2167, 0.70710677
        %v2186 = vand.u32 2147483647, %v2178
        %v2187 = vand.u32 2147483647, %v2179
        %v2188 = vand.u32 2147483647, %v2180
        %v2189 = vand.u32 2147483647, %v2181
        %v2190 = vand.u32 2147483647, %v2182
        %v2191 = vand.u32 2147483647, %v2183
        %v2192 = vand.u32 2147483647, %v2184
        %v2193 = vand.u32 2147483647, %v2185
        %v2194 = vmul.f32 %v2186, 0.3275911
        %v2195 = vmul.f32 %v2187, 0.3275911
        %v2196 = vmul.f32 %v2188, 0.3275911
        %v2197 = vmul.f32 %v2189, 0.3275911
        %v2198 = vmul.f32 %v2190, 0.3275911
        %v2199 = vmul.f32 %v2191, 0.3275911
        %v2200 = vmul.f32 %v2192, 0.3275911
        %v2201 = vmul.f32 %v2193, 0.3275911
        %v2202 = vadd.f32 %v2194, 1.0
        %v2203 = vadd.f32 %v2195, 1.0
        %v2204 = vadd.f32 %v2196, 1.0
        %v2205 = vadd.f32 %v2197, 1.0
        %v2206 = vadd.f32 %v2198, 1.0
        %v2207 = vadd.f32 %v2199, 1.0
        %v2208 = vadd.f32 %v2200, 1.0
        %v2209 = vadd.f32 %v2201, 1.0
        %v2210 = vrcp.pop %v2202
        %v2211 = vmul.f32 1.0, %v2210
        %v2212 = vrcp.pop %v2203
        %v2213 = vmul.f32 1.0, %v2212
        %v2214 = vrcp.pop %v2204
        %v2215 = vmul.f32 1.0, %v2214
        %v2216 = vrcp.pop %v2205
        %v2217 = vmul.f32 1.0, %v2216
        %v2218 = vrcp.pop %v2206
        %v2219 = vmul.f32 1.0, %v2218
        %v2220 = vrcp.pop %v2207
        %v2221 = vmul.f32 1.0, %v2220
        %v2222 = vrcp.pop %v2208
        %v2223 = vmul.f32 1.0, %v2222
        %v2224 = vrcp.pop %v2209
        %v2225 = vmul.f32 1.0, %v2224
        %v2226 = vmul.f32 %v2211, 1.0614054
        %v2227 = vmul.f32 %v2213, 1.0614054
        %v2228 = vmul.f32 %v2215, 1.0614054
        %v2229 = vmul.f32 %v2217, 1.0614054
        %v2230 = vmul.f32 %v2219, 1.0614054
        %v2231 = vmul.f32 %v2221, 1.0614054
        %v2232 = vmul.f32 %v2223, 1.0614054
        %v2233 = vmul.f32 %v2225, 1.0614054
        %v2234 = vadd.f32 %v2226, -1.4531521
        %v2235 = vadd.f32 %v2227, -1.4531521
        %v2236 = vadd.f32 %v2228, -1.4531521
        %v2237 = vadd.f32 %v2229, -1.4531521
        %v2238 = vadd.f32 %v2230, -1.4531521
        %v2239 = vadd.f32 %v2231, -1.4531521
        %v2240 = vadd.f32 %v2232, -1.4531521
        %v2241 = vadd.f32 %v2233, -1.4531521
        %v2242 = vmul.f32 %v2234, %v2211
        %v2243 = vmul.f32 %v2235, %v2213
        %v2244 = vmul.f32 %v2236, %v2215
        %v2245 = vmul.f32 %v2237, %v2217
        %v2246 = vmul.f32 %v2238, %v2219
        %v2247 = vmul.f32 %v2239, %v2221
        %v2248 = vmul.f32 %v2240, %v2223
        %v2249 = vmul.f32 %v2241, %v2225
        %v2250 = vadd.f32 %v2242, 1.4214138
        %v2251 = vadd.f32 %v2243, 1.4214138
        %v2252 = vadd.f32 %v2244, 1.4214138
        %v2253 = vadd.f32 %v2245, 1.4214138
        %v2254 = vadd.f32 %v2246, 1.4214138
        %v2255 = vadd.f32 %v2247, 1.4214138
        %v2256 = vadd.f32 %v2248, 1.4214138
        %v2257 = vadd.f32 %v2249, 1.4214138
        %v2258 = vmul.f32 %v2250, %v2211
        %v2259 = vmul.f32 %v2251, %v2213
        %v2260 = vmul.f32 %v2252, %v2215
        %v2261 = vmul.f32 %v2253, %v2217
        %v2262 = vmul.f32 %v2254, %v2219
        %v2263 = vmul.f32 %v2255, %v2221
        %v2264 = vmul.f32 %v2256, %v2223
        %v2265 = vmul.f32 %v2257, %v2225
        %v2266 = vadd.f32 %v2258, -0.28449672
        %v2267 = vadd.f32 %v2259, -0.28449672
        %v2268 = vadd.f32 %v2260, -0.28449672
        %v2269 = vadd.f32 %v2261, -0.28449672
        %v2270 = vadd.f32 %v2262, -0.28449672
        %v2271 = vadd.f32 %v2263, -0.28449672
        %v2272 = vadd.f32 %v2264, -0.28449672
        %v2273 = vadd.f32 %v2265, -0.28449672
        %v2274 = vmul.f32 %v2266, %v2211
        %v2275 = vmul.f32 %v2267, %v2213
        %v2276 = vmul.f32 %v2268, %v2215
        %v2277 = vmul.f32 %v2269, %v2217
        %v2278 = vmul.f32 %v2270, %v2219
        %v2279 = vmul.f32 %v2271, %v2221
        %v2280 = vmul.f32 %v2272, %v2223
        %v2281 = vmul.f32 %v2273, %v2225
        %v2282 = vadd.f32 %v2274, 0.2548296
        %v2283 = vadd.f32 %v2275, 0.2548296
        %v2284 = vadd.f32 %v2276, 0.2548296
        %v2285 = vadd.f32 %v2277, 0.2548296
        %v2286 = vadd.f32 %v2278, 0.2548296
        %v2287 = vadd.f32 %v2279, 0.2548296
        %v2288 = vadd.f32 %v2280, 0.2548296
        %v2289 = vadd.f32 %v2281, 0.2548296
        %v2290 = vmul.f32 %v2282, %v2211
        %v2291 = vmul.f32 %v2283, %v2213
        %v2292 = vmul.f32 %v2284, %v2215
        %v2293 = vmul.f32 %v2285, %v2217
        %v2294 = vmul.f32 %v2286, %v2219
        %v2295 = vmul.f32 %v2287, %v2221
        %v2296 = vmul.f32 %v2288, %v2223
        %v2297 = vmul.f32 %v2289, %v2225
        %v2298 = vsub.f32 0.0, %v2186
        %v2299 = vsub.f32 0.0, %v2187
        %v2300 = vsub.f32 0.0, %v2188
        %v2301 = vsub.f32 0.0, %v2189
        %v2302 = vsub.f32 0.0, %v2190
        %v2303 = vsub.f32 0.0, %v2191
        %v2304 = vsub.f32 0.0, %v2192
        %v2305 = vsub.f32 0.0, %v2193
        %v2306 = vmul.f32 %v2298, %v2186
        %v2307 = vmul.f32 %v2299, %v2187
        %v2308 = vmul.f32 %v2300, %v2188
        %v2309 = vmul.f32 %v2301, %v2189
        %v2310 = vmul.f32 %v2302, %v2190
        %v2311 = vmul.f32 %v2303, %v2191
        %v2312 = vmul.f32 %v2304, %v2192
        %v2313 = vmul.f32 %v2305, %v2193
        %v2314 = vmul.f32 %v2306, 1.442695
        %v2315 = vpow.pop %v2314
        %v2316 = vmul.f32 %v2307, 1.442695
        %v2317 = vpow.pop %v2316
        %v2318 = vmul.f32 %v2308, 1.442695
        %v2319 = vpow.pop %v2318
        %v2320 = vmul.f32 %v2309, 1.442695
        %v2321 = vpow.pop %v2320
        %v2322 = vmul.f32 %v2310, 1.442695
        %v2323 = vpow.pop %v2322
        %v2324 = vmul.f32 %v2311, 1.442695
        %v2325 = vpow.pop %v2324
        %v2326 = vmul.f32 %v2312, 1.442695
        %v2327 = vpow.pop %v2326
        %v2328 = vmul.f32 %v2313, 1.442695
        %v2329 = vpow.pop %v2328
        %v2330 = vmul.f32 %v2290, %v2315
        %v2331 = vmul.f32 %v2291, %v2317
        %v2332 = vmul.f32 %v2292, %v2319
        %v2333 = vmul.f32 %v2293, %v2321
        %v2334 = vmul.f32 %v2294, %v2323
        %v2335 = vmul.f32 %v2295, %v2325
        %v2336 = vmul.f32 %v2296, %v2327
        %v2337 = vmul.f32 %v2297, %v2329
        %v2338 = vsub.f32 1.0, %v2330
        %v2339 = vsub.f32 1.0, %v2331
        %v2340 = vsub.f32 1.0, %v2332
        %v2341 = vsub.f32 1.0, %v2333
        %v2342 = vsub.f32 1.0, %v2334
        %v2343 = vsub.f32 1.0, %v2335
        %v2344 = vsub.f32 1.0, %v2336
        %v2345 = vsub.f32 1.0, %v2337
        %vm2346 = vcmp.lt.f32.partialorder %v2178, 0.0
        %vm2347 = vcmp.lt.f32.partialorder %v2179, 0.0
        %vm2348 = vcmp.lt.f32.partialorder %v2180, 0.0
        %vm2349 = vcmp.lt.f32.partialorder %v2181, 0.0
        %vm2350 = vcmp.lt.f32.partialorder %v2182, 0.0
        %vm2351 = vcmp.lt.f32.partialorder %v2183, 0.0
        %vm2352 = vcmp.lt.f32.partialorder %v2184, 0.0
        %vm2353 = vcmp.lt.f32.partialorder %v2185, 0.0
        %v2354 = vsub.f32 0.0, %v2338
        %v2355 = vsub.f32 0.0, %v2339
        %v2356 = vsub.f32 0.0, %v2340
        %v2357 = vsub.f32 0.0, %v2341
        %v2358 = vsub.f32 0.0, %v2342
        %v2359 = vsub.f32 0.0, %v2343
        %v2360 = vsub.f32 0.0, %v2344
        %v2361 = vsub.f32 0.0, %v2345
        %v2362 = vsel %vm2346, %v2354, %v2338
        %v2363 = vsel %vm2347, %v2355, %v2339
        %v2364 = vsel %vm2348, %v2356, %v2340
        %v2365 = vsel %vm2349, %v2357, %v2341
        %v2366 = vsel %vm2350, %v2358, %v2342
        %v2367 = vsel %vm2351, %v2359, %v2343
        %v2368 = vsel %vm2352, %v2360, %v2344
        %v2369 = vsel %vm2353, %v2361, %v2345
        %v2370 = vadd.f32 %v2362, 1.0
        %v2371 = vadd.f32 %v2363, 1.0
        %v2372 = vadd.f32 %v2364, 1.0
        %v2373 = vadd.f32 %v2365, 1.0
        %v2374 = vadd.f32 %v2366, 1.0
        %v2375 = vadd.f32 %v2367, 1.0
        %v2376 = vadd.f32 %v2368, 1.0
        %v2377 = vadd.f32 %v2369, 1.0
        %v2378 = vmul.f32 %v2170, %v2370
        %v2379 = vmul.f32 %v2171, %v2371
        %v2380 = vmul.f32 %v2172, %v2372
        %v2381 = vmul.f32 %v2173, %v2373
        %v2382 = vmul.f32 %v2174, %v2374
        %v2383 = vmul.f32 %v2175, %v2375
        %v2384 = vmul.f32 %v2176, %v2376
        %v2385 = vmul.f32 %v2177, %v2377
        %v2386 = vmax.f32 %v2378, %v2379
        %v2388 = vrot.slane %v2386, 1
        %v2390 = vmax.f32 %v2386, %v2388
        %v2391 = vmax.f32 %v2380, %v2381
        %v2393 = vrot.slane %v2391, 1
        %v2395 = vmax.f32 %v2391, %v2393
        %v2396 = vmax.f32 %v2382, %v2383
        %v2398 = vrot.slane %v2396, 1
        %v2400 = vmax.f32 %v2396, %v2398
        %v2401 = vmax.f32 %v2384, %v2385
        %v2403 = vrot.slane %v2401, 1
        %v2405 = vmax.f32 %v2401, %v2403
        %v2407 = vrot.slane %v2390, 1
        %v2409 = vrot.slane %v2390, 2
        %v2411 = vrot.slane %v2390, 3
        %v2414 = vrot.slane %v2395, 4
        %v2416 = vrot.slane %v2395, 5
        %v2418 = vrot.slane %v2395, 6
        %v2420 = vrot.slane %v2395, 7
        %v2423 = vrot.slane %v2400, 1
        %v2425 = vrot.slane %v2400, 2
        %v2427 = vrot.slane %v2400, 3
        %v2430 = vrot.slane %v2405, 4
        %v2432 = vrot.slane %v2405, 5
        %v2434 = vrot.slane %v2405, 6
        %v2436 = vrot.slane %v2405, 7
        %vm2438 = vcmask 1040384
        %v2439 = vsel %vm2438, %v2390, %v2407
        %v2440 = vsel %vm414, %v2439, %v2409
        %vm2441 = vcmask 1042432
        %v2442 = vsel %vm2441, %v2440, %v2411
        %vm2443 = vcmask 1043456
        %v2444 = vsel %vm2443, %v2442, %v2414
        %vm2445 = vcmask 1044480
        %v2446 = vsel %vm2445, %v2444, %v2416
        %vm2447 = vcmask 1045504
        %v2448 = vsel %vm2447, %v2446, %v2418
        %vm2449 = vcmask 1046528
        %v2450 = vsel %vm2449, %v2448, %v2420
        %v2451 = vsel %vm2438, %v2400, %v2423
        %v2452 = vsel %vm414, %v2451, %v2425
        %v2453 = vsel %vm2441, %v2452, %v2427
        %v2454 = vsel %vm2443, %v2453, %v2430
        %v2455 = vsel %vm2445, %v2454, %v2432
        %v2456 = vsel %vm2447, %v2455, %v2434
        %v2457 = vsel %vm2449, %v2456, %v2436
        %2458 = vst [vmem:[%s217] sm:$0xff] %v2450
        %2459 = vst [vmem:[%s217 + $0x8] sm:$0xff] %v2457
        %s2460 = sand.u32 %s137, 1
        %s2461 = scalar_lea.sflag [#allocation3], %s2460
        %s2462 = sand.u32 %s137, 1
        %s2463 = smul.addr %s2462, 16
        %s2464 = scalar_lea.vmem [#allocation2], %s2463
        // Predicated region
        $region41: #{convdown_forward.1} parent=39 // pred_check
          %p2465 = pneg %p147
        $region42: #{convdown_forward.1} parent=39 // pred_check_branch
          %2467 = sbr.rel (%p2465) target = $region44
        $region43: #{convdown_forward.1} parent=39 // pred_region
          %s2469 = ssub.s32 256, 256
          %2470 = vsyncadd %s2461, %s2469
          %s2471 = smul.addr %s19, 2
          %s2472 = smul.addr %s2471, 128
          %s2473 = scalar_lea.hbm %s5, %s2472
          %s2474 = sshll.u32 %s2464, 4
          %s2475 = int_to_ptr.vmem [resolvable:$true] %s2474
          %2480 = dma.vmem_to_hbm [thread:$0]  %s2475, 256, %s2473, %s2461, 128, 128, 8
        $region44: #{convdown_forward.1} parent=39 // pred_fallthru
          _
      $region40: #{convdown_forward.1} parent=5 // pred_fallthru
        _
      %p2481 = scmp.le.s32.totalorder 2, %s14
      // Predicated region
      $region45: #{convdown_forward.1} parent=5 // pred_check
        %p2482 = pneg %p2481
      $region46: #{convdown_forward.1} parent=5 // pred_check_branch
        %2484 = sbr.rel (%p2482) target = $region48
      $region47: #{convdown_forward.1} parent=5 // pred_region
        %s2485 = ssub.s32 %s14, 2
        // Predicated region
        $region49: #{convdown_forward.1} parent=47 // pred_check
          %p2486 = pneg %p153
        $region50: #{convdown_forward.1} parent=47 // pred_check_branch
          %2488 = sbr.rel (%p2486) target = $region52
        $region51: #{convdown_forward.1} parent=47 // pred_region
          %s2489 = sand.u32 %s138, 1
          %s2490 = scalar_lea.sflag [#allocation3], %s2489
          %s2491 = sand.u32 %s138, 1
          %s2492 = smul.addr %s2491, 16
          %s2493 = scalar_lea.vmem [#allocation2], %s2492
          %2494 = dma.done %s2490, 256
        $region52: #{convdown_forward.1} parent=47 // pred_fallthru
          _
      $region48: #{convdown_forward.1} parent=5 // pred_fallthru
        _
    $region6: #{convdown_forward.1} parent=1 // loop_footer
      %s18 = sadd.s32 1, %s14
    $region7: #{convdown_forward.1} parent=1 // loop_footer_branch
      %13 = sbr.rel target = $region3
    $region8: #{convdown_forward.1} parent=1 // loop_exit
      _
    %2495 = vsyncpa [#allocation3], 1
    %s2496 = scalar_lea.sflag [#allocation3], 1
    %2497 = vsyncpa %s2496, 1

</llo_original>
